<compile_context>
chip_gen: v7x
topology: tpu7x:2x2x1
jax: 0.10.0
libtpu: 0.0.40
codegen_flags: <defaults>
</compile_context>

<pallas_src>
import functools
import math

import jax
import jax.numpy as jnp
import numpy as np
from jax import lax
from jax.experimental import pallas as pl
from jax.experimental.pallas import tpu as pltpu


# ----------------------------------------------------------------------------
# Per-generation VMEM budgeting
# ----------------------------------------------------------------------------
def _tpu_vmem_capacity_bytes():
    try:
        return int(pltpu.get_tpu_info().vmem_capacity_bytes)
    except Exception:
        return 64 << 20          # v7x floor: be conservative if the query fails


_VMEM_CAPACITY = _tpu_vmem_capacity_bytes()
# Scoped VMEM we request from Mosaic (well under physical on every generation).
_VMEM_LIMIT = int(min(_VMEM_CAPACITY * 0.5, 64 << 20))
# Budget for one chunk's working set (x blocks + pre scratch + out blocks),
# leaving headroom for resident weights, pipelining slack and compiler temps.
_CHUNK_BUDGET = _VMEM_LIMIT // 2
# Bounds the statically-unrolled projection-scatter loop (compile time); the
# VMEM budget bounds everything else.
_MAX_CHUNK = 32


# ----------------------------------------------------------------------------
# Pallas kernels
# ----------------------------------------------------------------------------
def _matmul_bias_kernel(x_ref, w_ref, b_ref, o_ref):
    """out = x @ W + b  (used only for the small FC head)."""
    o_ref[...] = (
        jnp.dot(x_ref[...], w_ref[...], preferred_element_type=jnp.float32)
        + b_ref[...]
    ).astype(o_ref.dtype)


def _lstm_layer_kernel(*refs, chunk, batch, hidden, n_x, bidir, seq_out):
    """One LSTM layer (one or both directions): fused projection + recurrence.

    Grid = (T // chunk,), sequential ("arbitrary").  Ref layout (in order):
      xs      : n_dir * n_x refs, each (Tc*B, K_j) bf16
                (direction-major; the backward direction's stream uses a
                 mirrored chunk index_map so it sees its own time window)
      wihs    : n_dir * n_x refs, each (K_j, 4H) bf16 (resident)
      biases  : n_dir refs, each (1, 4H) f32 (resident)
      whhs    : n_dir refs, each (H, 4H) bf16 (resident)
      outs    : seq_out: n_dir refs (Tc, B, H);  else: 1 ref (B, H) resident
      scratch : n_dir x (Tc, B, 4H) f32 pre-gates,
                (n_dir, B, H) f32 h state, (n_dir, B, H) f32 c state
    Gate order is [i, f, o, g] so one sigmoid covers 3H lanes and one tanh H.
    """
    n_dir = 2 if bidir else 1
    Tc, B, H = chunk, batch, hidden

    pos = 0
    xs = refs[pos:pos + n_dir * n_x]; pos += n_dir * n_x
    wihs = refs[pos:pos + n_dir * n_x]; pos += n_dir * n_x
    biases = refs[pos:pos + n_dir]; pos += n_dir
    whhs = refs[pos:pos + n_dir]; pos += n_dir
    n_out = n_dir if seq_out else 1
    outs = refs[pos:pos + n_out]; pos += n_out
    pre_scs = refs[pos:pos + n_dir]; pos += n_dir
    h_sc = refs[pos]
    c_sc = refs[pos + 1]

    @pl.when(pl.program_id(0) == 0)
    def _():
        h_sc[...] = jnp.zeros_like(h_sc)
        c_sc[...] = jnp.zeros_like(c_sc)

    # ---- fused input projection: one MXU-filling (Tc*B, K)@(K, 4H) per dir ----
    for d in range(n_dir):
        acc = jnp.dot(xs[d * n_x][...], wihs[d * n_x][...],
                      preferred_element_type=jnp.float32)
        for j in range(1, n_x):
            acc = acc + jnp.dot(xs[d * n_x + j][...], wihs[d * n_x + j][...],
                                preferred_element_type=jnp.float32)
        acc = acc + biases[d][...]                    # (1,4H) broadcast
        # Scatter chunk rows into the (Tc, B, 4H) scratch so the serial loop can
        # index it with a dynamic *leading* index (cheap untiled-dim indexing).
        for i in range(Tc):
            pre_scs[d][i] = acc[i * B:(i + 1) * B, :]

    whh_vals = [whhs[d][...] for d in range(n_dir)]   # hoisted, read once/chunk

    def cell(gates, c_prev):
        sig = jax.nn.sigmoid(gates[:, :3 * H])        # one sigmoid over 3H lanes
        i_g = sig[:, 0:H]
        f_g = sig[:, H:2 * H]
        o_g = sig[:, 2 * H:3 * H]
        g_g = jnp.tanh(gates[:, 3 * H:])
        c_new = f_g * c_prev + i_g * g_g
        h_new = o_g * jnp.tanh(c_new)
        return h_new, c_new

    def step(i, carry):
        h_f, c_f = carry[0], carry[1]
        # forward direction: local time i inside chunk c
        gates_f = pre_scs[0][i] + jnp.dot(
            h_f.astype(whh_vals[0].dtype), whh_vals[0],
            preferred_element_type=jnp.float32)
        h_f, c_f = cell(gates_f, c_f)
        if seq_out:
            outs[0][i] = h_f.astype(outs[0].dtype)
        new = [h_f, c_f]
        if bidir:
            # backward direction: walks its (mirrored) chunk in reverse order;
            # the two recurrent dots are independent and interleave in the MXU.
            tb = Tc - 1 - i
            h_b, c_b = carry[2], carry[3]
            gates_b = pre_scs[1][tb] + jnp.dot(
                h_b.astype(whh_vals[1].dtype), whh_vals[1],
                preferred_element_type=jnp.float32)
            h_b, c_b = cell(gates_b, c_b)
            outs[1][tb] = h_b.astype(outs[1].dtype)
            new += [h_b, c_b]
        return tuple(new)

    init = [h_sc[0], c_sc[0]]
    if bidir:
        init += [h_sc[1], c_sc[1]]
    final = lax.fori_loop(0, Tc, step, tuple(init), unroll=math.gcd(Tc, 8))

    h_sc[0] = final[0]
    c_sc[0] = final[1]
    if bidir:
        h_sc[1] = final[2]
        c_sc[1] = final[3]
    if not seq_out:
        outs[0][...] = final[0].astype(outs[0].dtype)   # resident (B, H) block


# ----------------------------------------------------------------------------
# pallas_call wrappers
# ----------------------------------------------------------------------------
def matmul_bias_pallas(x, w_t, b, block_m=512):
    """x: (M, K), w_t: (K, N), b: (1, N) -> (M, N) float32 (FC head)."""
    M, K = x.shape
    N = w_t.shape[1]
    bm = M
    for cand in range(min(block_m, M), 0, -1):
        if M % cand == 0 and (cand % 8 == 0 or cand == M):
            bm = cand
            break
    return pl.pallas_call(
        _matmul_bias_kernel,
        out_shape=jax.ShapeDtypeStruct((M, N), jnp.float32),
        grid_spec=pltpu.PrefetchScalarGridSpec(
            num_scalar_prefetch=0,
            grid=(M // bm,),
            in_specs=[
                pl.BlockSpec((bm, K), lambda i: (i, 0)),
                pl.BlockSpec((K, N), lambda i: (0, 0)),
                pl.BlockSpec((1, N), lambda i: (0, 0)),
            ],
            out_specs=pl.BlockSpec((bm, N), lambda i: (i, 0)),
        ),
        compiler_params=pltpu.CompilerParams(
            dimension_semantics=("parallel",),
            vmem_limit_bytes=_VMEM_LIMIT,
        ),
    )(x, w_t, b)


def _pick_chunk(T, B, k_total, H, n_dir, seq_out):
    """Largest divisor-of-T chunk whose working set fits the VMEM budget."""
    def usage(tc):
        x_b = 2 * n_dir * tc * B * k_total * 2            # double-buffered bf16 x
        pre_b = n_dir * tc * B * 4 * H * 4                # f32 pre scratch
        acc_b = tc * B * 4 * H * 4                        # live projection value
        out_b = (2 * n_dir * tc * B * H * 2) if seq_out else 0
        return x_b + pre_b + acc_b + out_b

    # (tc*B) % 16 keeps the flattened bf16 x block sublane-tileable.
    valid = [tc for tc in range(1, T + 1)
             if T % tc == 0 and ((tc * B) % 16 == 0 or tc == T)]
    pick = valid[0]
    for tc in valid:
        if tc <= _MAX_CHUNK and usage(tc) <= _CHUNK_BUDGET:
            pick = tc
    return pick


def lstm_layer_pallas(xs, dir_params, *, T, B, bidir, seq_out,
                      out_dtype=jnp.bfloat16):
    """Run one LSTM layer (fused projection + recurrence, 1 or 2 directions).

    xs         : list of (T*B, K_j) bf16 inputs (2 entries after a bidirectional
                 layer — fwd/bwd hidden streams, never concatenated in HBM).
    dir_params : per-direction dict with "w_ih_t_parts" (list matching xs),
                 "w_hh_t" (H, 4H) bf16, "bias" (1, 4H) f32.
    Returns a tuple: (hs_f[, hs_b]) each (T, B, H) if seq_out, else (h_last,)
    with h_last (B, H) f32.
    """
    assert not (bidir and not seq_out)
    n_x = len(xs)
    n_dir = 2 if bidir else 1
    H = dir_params[0]["w_hh_t"].shape[0]
    G = 4 * H
    k_total = sum(int(xj.shape[1]) for xj in xs)
    Tc = _pick_chunk(T, B, k_total, H, n_dir, seq_out)
    nc = T // Tc

    fwd2 = lambda c: (c, 0)
    bwd2 = lambda c: (nc - 1 - c, 0)
    fwd3 = lambda c: (c, 0, 0)
    bwd3 = lambda c: (nc - 1 - c, 0, 0)
    const2 = lambda c: (0, 0)

    args, in_specs = [], []
    for d in range(n_dir):
        cmap = fwd2 if d == 0 else bwd2
        for xj in xs:
            in_specs.append(pl.BlockSpec((Tc * B, int(xj.shape[1])), cmap))
            args.append(xj)
    for d in range(n_dir):
        parts = dir_params[d]["w_ih_t_parts"]
        assert len(parts) == n_x
        for wp in parts:
            in_specs.append(pl.BlockSpec(tuple(wp.shape), const2))
            args.append(wp)
    for d in range(n_dir):
        in_specs.append(pl.BlockSpec(tuple(dir_params[d]["bias"].shape), const2))
        args.append(dir_params[d]["bias"])
    for d in range(n_dir):
        in_specs.append(pl.BlockSpec(tuple(dir_params[d]["w_hh_t"].shape), const2))
        args.append(dir_params[d]["w_hh_t"])

    if seq_out:
        out_shape = tuple(jax.ShapeDtypeStruct((T, B, H), out_dtype)
                          for _ in range(n_dir))
        out_specs = tuple(pl.BlockSpec((Tc, B, H), fwd3 if d == 0 else bwd3)
                          for d in range(n_dir))
    else:
        out_shape = (jax.ShapeDtypeStruct((B, H), jnp.float32),)
        out_specs = (pl.BlockSpec((B, H), const2),)     # resident block

    scratch = [pltpu.VMEM((Tc, B, G), jnp.float32) for _ in range(n_dir)]
    scratch += [pltpu.VMEM((n_dir, B, H), jnp.float32),
                pltpu.VMEM((n_dir, B, H), jnp.float32)]

    kernel = functools.partial(
        _lstm_layer_kernel, chunk=Tc, batch=B, hidden=H,
        n_x=n_x, bidir=bidir, seq_out=seq_out)

    outs = pl.pallas_call(
        kernel,
        out_shape=out_shape,
        grid_spec=pltpu.PrefetchScalarGridSpec(
            num_scalar_prefetch=0,
            grid=(nc,),
            in_specs=in_specs,
            out_specs=out_specs,
            scratch_shapes=scratch,
        ),
        compiler_params=pltpu.CompilerParams(
            dimension_semantics=("arbitrary",),   # serial recurrence over chunks
            vmem_limit_bytes=_VMEM_LIMIT,
        ),
    )(*args)
    if not isinstance(outs, (tuple, list)):
        outs = (outs,)
    return tuple(outs)


# ----------------------------------------------------------------------------
# Parameters (PyTorch-compatible init) + packing for the kernels
# ----------------------------------------------------------------------------
def _reorder_gates(w, axis=0):
    """PyTorch gate order [i, f, g, o] -> kernel order [i, f, o, g]."""
    i, f, g, o = jnp.split(w, 4, axis=axis)
    return jnp.concatenate([i, f, o, g], axis=axis)


def init_lstm_params(key, input_size, hidden_size, num_layers, output_size,
                     bidirectional=False, mxu_dtype=jnp.bfloat16):
    """Uniform(-1/sqrt(H), 1/sqrt(H)) init (PyTorch shapes).  Keeps both the raw
    f32 PyTorch-layout weights (for the reference) and the packed bf16
    transposed/reordered weights (for the kernels)."""
    num_dir = 2 if bidirectional else 1
    H = hidden_size
    stdv = 1.0 / math.sqrt(H)

    def unif(k, shape, s):
        return jax.random.uniform(k, shape, jnp.float32, -s, s)

    layers = []
    for layer in range(num_layers):
        layer_in = input_size if layer == 0 else H * num_dir
        # Layers after a bidirectional layer consume TWO input streams; split
        # W_ih along K so pre = x_f @ W_top + x_b @ W_bot (no HBM concat).
        n_parts = num_dir if layer > 0 else 1
        dirs = []
        for _ in range(num_dir):
            key, k1, k2, k3, k4 = jax.random.split(key, 5)
            w_ih = unif(k1, (4 * H, layer_in), stdv)     # PyTorch layout
            w_hh = unif(k2, (4 * H, H), stdv)
            b_ih = unif(k3, (4 * H,), stdv)
            b_hh = unif(k4, (4 * H,), stdv)
            w_ih_t = _reorder_gates(w_ih, axis=0).T      # (layer_in, 4H)
            dirs.append({
                "raw": {"w_ih": w_ih, "w_hh": w_hh, "b_ih": b_ih, "b_hh": b_hh},
                "packed": {
                    "w_ih_t_parts": [p.astype(mxu_dtype)
                                     for p in jnp.split(w_ih_t, n_parts, axis=0)],
                    "w_hh_t": _reorder_gates(w_hh, axis=0).T.astype(mxu_dtype),
                    "bias": _reorder_gates(b_ih + b_hh, axis=0)[None, :],  # f32
                },
            })
        layers.append(dirs)

    fc_in = H * num_dir
    key, k1, k2 = jax.random.split(key, 3)
    fs = 1.0 / math.sqrt(fc_in)
    fc_w = unif(k1, (output_size, fc_in), fs)
    fc_b = unif(k2, (output_size,), fs)
    return {
        "layers": layers,
        "fc": {"raw": {"w": fc_w, "b": fc_b},
               "packed": {"w_t": fc_w.T, "b": fc_b[None, :]}},
    }


# ----------------------------------------------------------------------------
# Forward pass (matches: out, _ = lstm(x); out = fc(out[:, -1, :]))
# ----------------------------------------------------------------------------
@functools.partial(jax.jit, static_argnames=("bidirectional",))
def lstm_forward(params, x_bti, bidirectional=False):
    x = jnp.transpose(x_bti, (1, 0, 2)).astype(jnp.float32)   # (T, B, I)
    T, B, I = x.shape
    mxu_dtype = params["layers"][0][0]["packed"]["w_hh_t"].dtype
    xs = [x.reshape(T * B, I).astype(mxu_dtype)]
    num_layers = len(params["layers"])
    h_last = None

    for l, dirs in enumerate(params["layers"]):
        last = (l == num_layers - 1)
        if not bidirectional:
            p = dirs[0]["packed"]
            if last:
                # Only the final hidden state is needed downstream.
                (h_last,) = lstm_layer_pallas(xs, [p], T=T, B=B,
                                              bidir=False, seq_out=False)
            else:
                (hs,) = lstm_layer_pallas(xs, [p], T=T, B=B,
                                          bidir=False, seq_out=True)
                xs = [hs.reshape(T * B, -1)]
        else:
            pf, pb = dirs[0]["packed"], dirs[1]["packed"]
            if last:
                # out[:, -1, :] only: forward dir -> full recurrence, resident
                # final hidden; backward dir at t = T-1 is the FIRST step of the
                # reversed scan -> one cell update from zero state on x[T-1].
                (h_f,) = lstm_layer_pallas(xs, [pf], T=T, B=B,
                                           bidir=False, seq_out=False)
                xs_last = [xj[(T - 1) * B:] for xj in xs]
                (h_b,) = lstm_layer_pallas(xs_last, [pb], T=1, B=B,
                                           bidir=False, seq_out=False)
                h_last = jnp.concatenate([h_f, h_b], axis=-1)    # tiny (B, 2H)
            else:
                hs_f, hs_b = lstm_layer_pallas(xs, [pf, pb], T=T, B=B,
                                               bidir=True, seq_out=True)
                # Keep fwd/bwd as two streams (no (T,B,2H) concat in HBM); the
                # next layer's projection sums x_f @ W_top + x_b @ W_bot.
                xs = [hs_f.reshape(T * B, -1), hs_b.reshape(T * B, -1)]

    fc = params["fc"]["packed"]
    return matmul_bias_pallas(h_last, fc["w_t"], fc["b"])       # (B, O)


# ----------------------------------------------------------------------------
# Pure-JAX references
# ----------------------------------------------------------------------------
def lstm_forward_ref(params, x_bti, bidirectional=False, mxu_dtype=jnp.float32):
    """mxu_dtype=float32 -> exact PyTorch-f32 math.  mxu_dtype=bfloat16 emulates
    the kernel's bf16 matmul operands / bf16 inter-layer activations (f32
    accumulation and f32 cell math in both)."""
    x = jnp.transpose(x_bti, (1, 0, 2)).astype(jnp.float32)
    num_layers = len(params["layers"])

    def run_dir(x_seq, raw):
        w_ih = raw["w_ih"].astype(mxu_dtype)
        w_hh = raw["w_hh"].astype(mxu_dtype)
        b = (raw["b_ih"] + raw["b_hh"]).astype(jnp.float32)
        H = raw["w_hh"].shape[1]
        Bn = x_seq.shape[1]

        def step(carry, x_t):
            h, c = carry
            gates = (jnp.dot(x_t.astype(mxu_dtype), w_ih.T,
                             preferred_element_type=jnp.float32)
                     + jnp.dot(h.astype(mxu_dtype), w_hh.T,
                               preferred_element_type=jnp.float32) + b)
            i = jax.nn.sigmoid(gates[:, 0 * H:1 * H])
            f = jax.nn.sigmoid(gates[:, 1 * H:2 * H])
            g = jnp.tanh(gates[:, 2 * H:3 * H])
            o = jax.nn.sigmoid(gates[:, 3 * H:4 * H])
            c = f * c + i * g
            h = o * jnp.tanh(c)
            return (h, c), h

        init = (jnp.zeros((Bn, H), jnp.float32), jnp.zeros((Bn, H), jnp.float32))
        _, hs = jax.lax.scan(step, init, x_seq)
        return hs

    for l, dirs in enumerate(params["layers"]):
        fwd = run_dir(x, dirs[0]["raw"])
        if bidirectional:
            bwd = jnp.flip(run_dir(jnp.flip(x, axis=0), dirs[1]["raw"]), axis=0)
            x = jnp.concatenate([fwd, bwd], axis=-1)
        else:
            x = fwd
        if l != num_layers - 1:
            # emulate the kernel's reduced-precision inter-layer storage
            x = x.astype(mxu_dtype).astype(jnp.float32)

    fc = params["fc"]["raw"]
    return x[-1] @ fc["w"].T + fc["b"]


# ----------------------------------------------------------------------------
if __name__ == "__main__":
    B = 2
    input_size, hidden_size, num_layers, output_size = 16, 32, 2, 8

    key = jax.random.PRNGKey(0)
    # Cases cover: single-chunk grid, multi-chunk grid (nc > 1), the resident
    # last-hidden output path, and the fused bidirectional path with the
    # last-layer shortcut + two-stream inter-layer inputs.
    for bidirectional, T in ((False, 8), (False, 48), (True, 48)):
        key, pkey, xkey = jax.random.split(key, 3)
        params = init_lstm_params(pkey, input_size, hidden_size, num_layers,
                                  output_size, bidirectional=bidirectional)
        x = jax.random.normal(xkey, (B, T, input_size), jnp.float32)

        out = lstm_forward(params, x, bidirectional=bidirectional)
        out = jax.block_until_ready(out)
        assert out.shape == (B, output_size)

        # strict: reference that emulates the kernel's bf16 matmul operands
        ref_bf16 = lstm_forward_ref(params, x, bidirectional=bidirectional,
                                    mxu_dtype=jnp.bfloat16)
        np.testing.assert_allclose(np.asarray(out), np.asarray(ref_bf16),
                                   rtol=5e-3, atol=5e-3)
        # sanity: full-f32 PyTorch-style reference (bf16 MXU operands are an
        # intentional approximation, so use a loose bound here)
        ref_f32 = lstm_forward_ref(params, x, bidirectional=bidirectional,
                                   mxu_dtype=jnp.float32)
        np.testing.assert_allclose(np.asarray(out), np.asarray(ref_f32),
                                   rtol=6e-2, atol=6e-2)

    print("KERNEL_OK")
</pallas_src>

<mosaic_0001>
module attributes {stable_mosaic.version = 11 : i64} {
  func.func @_lstm_layer_kernel(%arg0: i32, %arg1: memref<16x32xbf16, #tpu.memory_space<vmem>>, %arg2: memref<32x128xbf16, #tpu.memory_space<vmem>>, %arg3: memref<1x128xf32, #tpu.memory_space<vmem>>, %arg4: memref<32x128xbf16, #tpu.memory_space<vmem>>, %arg5: memref<2x32xf32, #tpu.memory_space<vmem>>, %arg6: memref<8x2x128xf32, #tpu.memory_space<vmem>>, %arg7: memref<1x2x32xf32, #tpu.memory_space<vmem>>, %arg8: memref<1x2x32xf32, #tpu.memory_space<vmem>>) attributes {dimension_semantics = [#tpu.dimension_semantics<arbitrary>], iteration_bounds = array<i64: 1>, scalar_prefetch = 0 : i64, scratch_operands = 3 : i64, tpu.core_type = #tpu.core_type<tc>, window_params = [{transform_indices = @transform_0, window_bounds = array<i64: 16, 32>}, {pipeline_mode = #tpu.pipeline_mode<synchronous>, transform_indices = @transform_1, window_bounds = array<i64: 32, 128>}, {pipeline_mode = #tpu.pipeline_mode<synchronous>, transform_indices = @transform_2, window_bounds = array<i64: 1, 128>}, {pipeline_mode = #tpu.pipeline_mode<synchronous>, transform_indices = @transform_3, window_bounds = array<i64: 32, 128>}, {pipeline_mode = #tpu.pipeline_mode<synchronous>, transform_indices = @transform_4, window_bounds = array<i64: 2, 32>}]} {
    %c0_i32 = arith.constant 0 : i32
    %0 = arith.cmpi eq, %arg0, %c0_i32 : i32
    %1 = arith.extui %0 : i1 to i32
    %c0_i32_0 = arith.constant 0 : i32
    %2 = arith.cmpi ne, %1, %c0_i32_0 : i32
    scf.if %2 {
      %cst_72 = arith.constant 0.000000e+00 : f32
      %229 = vector.broadcast %cst_72 : f32 to vector<1x2x32xf32>
      %c0_73 = arith.constant 0 : index
      %c0_74 = arith.constant 0 : index
      %c0_75 = arith.constant 0 : index
      %230 = vector.load %arg7[%c0_73, %c0_74, %c0_75] : memref<1x2x32xf32, #tpu.memory_space<vmem>>, vector<1x2x32xf32>
      tpu.vector_store %arg7[%c0_73, %c0_74, %c0_75], %229 {strides = array<i32>} : memref<1x2x32xf32, #tpu.memory_space<vmem>>, vector<1x2x32xf32>,
      %cst_76 = arith.constant 0.000000e+00 : f32
      %231 = vector.broadcast %cst_76 : f32 to vector<1x2x32xf32>
      %c0_77 = arith.constant 0 : index
      %c0_78 = arith.constant 0 : index
      %c0_79 = arith.constant 0 : index
      %232 = vector.load %arg8[%c0_77, %c0_78, %c0_79] : memref<1x2x32xf32, #tpu.memory_space<vmem>>, vector<1x2x32xf32>
      tpu.vector_store %arg8[%c0_77, %c0_78, %c0_79], %231 {strides = array<i32>} : memref<1x2x32xf32, #tpu.memory_space<vmem>>, vector<1x2x32xf32>,
    } else {
    }
    %c0 = arith.constant 0 : index
    %c0_1 = arith.constant 0 : index
    %3 = vector.load %arg1[%c0, %c0_1] : memref<16x32xbf16, #tpu.memory_space<vmem>>, vector<16x32xbf16>
    %c0_2 = arith.constant 0 : index
    %c0_3 = arith.constant 0 : index
    %4 = vector.load %arg2[%c0_2, %c0_3] : memref<32x128xbf16, #tpu.memory_space<vmem>>, vector<32x128xbf16>
    %cst = arith.constant dense<0.000000e+00> : vector<16x128xf32>
    %5 = tpu.matmul %3, %4, %cst {dimension_numbers = #tpu.dot_dimension_numbers<[1], [0], [0], [1], [0, 0, 1, 1], [], []>} : vector<16x32xbf16>, vector<32x128xbf16>, vector<16x128xf32> -> vector<16x128xf32>
    %c0_4 = arith.constant 0 : index
    %c0_5 = arith.constant 0 : index
    %6 = vector.load %arg3[%c0_4, %c0_5] : memref<1x128xf32, #tpu.memory_space<vmem>>, vector<1x128xf32>
    %7 = vector.broadcast %6 : vector<1x128xf32> to vector<16x128xf32>
    %8 = arith.addf %5, %7 : vector<16x128xf32>
    %9 = vector.extract_strided_slice %8 {offsets = [0, 0], sizes = [2, 128], strides = [1, 1]} : vector<16x128xf32> to vector<2x128xf32>
    %c0_6 = arith.constant 0 : index
    %c0_7 = arith.constant 0 : index
    %c0_8 = arith.constant 0 : index
    %10 = vector.load %arg6[%c0_6, %c0_7, %c0_8] : memref<8x2x128xf32, #tpu.memory_space<vmem>>, vector<1x2x128xf32>
    %11 = vector.shape_cast %10 : vector<1x2x128xf32> to vector<2x128xf32>
    %12 = vector.shape_cast %9 : vector<2x128xf32> to vector<1x2x128xf32>
    tpu.vector_store %arg6[%c0_6, %c0_7, %c0_8], %12 {strides = array<i32>} : memref<8x2x128xf32, #tpu.memory_space<vmem>>, vector<1x2x128xf32>,
    %13 = vector.extract_strided_slice %8 {offsets = [2, 0], sizes = [2, 128], strides = [1, 1]} : vector<16x128xf32> to vector<2x128xf32>
    %c1 = arith.constant 1 : index
    %c0_9 = arith.constant 0 : index
    %c0_10 = arith.constant 0 : index
    %14 = vector.load %arg6[%c1, %c0_9, %c0_10] : memref<8x2x128xf32, #tpu.memory_space<vmem>>, vector<1x2x128xf32>
    %15 = vector.shape_cast %14 : vector<1x2x128xf32> to vector<2x128xf32>
    %16 = vector.shape_cast %13 : vector<2x128xf32> to vector<1x2x128xf32>
    tpu.vector_store %arg6[%c1, %c0_9, %c0_10], %16 {strides = array<i32>} : memref<8x2x128xf32, #tpu.memory_space<vmem>>, vector<1x2x128xf32>,
    %17 = vector.extract_strided_slice %8 {offsets = [4, 0], sizes = [2, 128], strides = [1, 1]} : vector<16x128xf32> to vector<2x128xf32>
    %c2 = arith.constant 2 : index
    %c0_11 = arith.constant 0 : index
    %c0_12 = arith.constant 0 : index
    %18 = vector.load %arg6[%c2, %c0_11, %c0_12] : memref<8x2x128xf32, #tpu.memory_space<vmem>>, vector<1x2x128xf32>
    %19 = vector.shape_cast %18 : vector<1x2x128xf32> to vector<2x128xf32>
    %20 = vector.shape_cast %17 : vector<2x128xf32> to vector<1x2x128xf32>
    tpu.vector_store %arg6[%c2, %c0_11, %c0_12], %20 {strides = array<i32>} : memref<8x2x128xf32, #tpu.memory_space<vmem>>, vector<1x2x128xf32>,
    %21 = vector.extract_strided_slice %8 {offsets = [6, 0], sizes = [2, 128], strides = [1, 1]} : vector<16x128xf32> to vector<2x128xf32>
    %c3 = arith.constant 3 : index
    %c0_13 = arith.constant 0 : index
    %c0_14 = arith.constant 0 : index
    %22 = vector.load %arg6[%c3, %c0_13, %c0_14] : memref<8x2x128xf32, #tpu.memory_space<vmem>>, vector<1x2x128xf32>
    %23 = vector.shape_cast %22 : vector<1x2x128xf32> to vector<2x128xf32>
    %24 = vector.shape_cast %21 : vector<2x128xf32> to vector<1x2x128xf32>
    tpu.vector_store %arg6[%c3, %c0_13, %c0_14], %24 {strides = array<i32>} : memref<8x2x128xf32, #tpu.memory_space<vmem>>, vector<1x2x128xf32>,
    %25 = vector.extract_strided_slice %8 {offsets = [8, 0], sizes = [2, 128], strides = [1, 1]} : vector<16x128xf32> to vector<2x128xf32>
    %c4 = arith.constant 4 : index
    %c0_15 = arith.constant 0 : index
    %c0_16 = arith.constant 0 : index
    %26 = vector.load %arg6[%c4, %c0_15, %c0_16] : memref<8x2x128xf32, #tpu.memory_space<vmem>>, vector<1x2x128xf32>
    %27 = vector.shape_cast %26 : vector<1x2x128xf32> to vector<2x128xf32>
    %28 = vector.shape_cast %25 : vector<2x128xf32> to vector<1x2x128xf32>
    tpu.vector_store %arg6[%c4, %c0_15, %c0_16], %28 {strides = array<i32>} : memref<8x2x128xf32, #tpu.memory_space<vmem>>, vector<1x2x128xf32>,
    %29 = vector.extract_strided_slice %8 {offsets = [10, 0], sizes = [2, 128], strides = [1, 1]} : vector<16x128xf32> to vector<2x128xf32>
    %c5 = arith.constant 5 : index
    %c0_17 = arith.constant 0 : index
    %c0_18 = arith.constant 0 : index
    %30 = vector.load %arg6[%c5, %c0_17, %c0_18] : memref<8x2x128xf32, #tpu.memory_space<vmem>>, vector<1x2x128xf32>
    %31 = vector.shape_cast %30 : vector<1x2x128xf32> to vector<2x128xf32>
    %32 = vector.shape_cast %29 : vector<2x128xf32> to vector<1x2x128xf32>
    tpu.vector_store %arg6[%c5, %c0_17, %c0_18], %32 {strides = array<i32>} : memref<8x2x128xf32, #tpu.memory_space<vmem>>, vector<1x2x128xf32>,
    %33 = vector.extract_strided_slice %8 {offsets = [12, 0], sizes = [2, 128], strides = [1, 1]} : vector<16x128xf32> to vector<2x128xf32>
    %c6 = arith.constant 6 : index
    %c0_19 = arith.constant 0 : index
    %c0_20 = arith.constant 0 : index
    %34 = vector.load %arg6[%c6, %c0_19, %c0_20] : memref<8x2x128xf32, #tpu.memory_space<vmem>>, vector<1x2x128xf32>
    %35 = vector.shape_cast %34 : vector<1x2x128xf32> to vector<2x128xf32>
    %36 = vector.shape_cast %33 : vector<2x128xf32> to vector<1x2x128xf32>
    tpu.vector_store %arg6[%c6, %c0_19, %c0_20], %36 {strides = array<i32>} : memref<8x2x128xf32, #tpu.memory_space<vmem>>, vector<1x2x128xf32>,
    %37 = vector.extract_strided_slice %8 {offsets = [14, 0], sizes = [2, 128], strides = [1, 1]} : vector<16x128xf32> to vector<2x128xf32>
    %c7 = arith.constant 7 : index
    %c0_21 = arith.constant 0 : index
    %c0_22 = arith.constant 0 : index
    %38 = vector.load %arg6[%c7, %c0_21, %c0_22] : memref<8x2x128xf32, #tpu.memory_space<vmem>>, vector<1x2x128xf32>
    %39 = vector.shape_cast %38 : vector<1x2x128xf32> to vector<2x128xf32>
    %40 = vector.shape_cast %37 : vector<2x128xf32> to vector<1x2x128xf32>
    tpu.vector_store %arg6[%c7, %c0_21, %c0_22], %40 {strides = array<i32>} : memref<8x2x128xf32, #tpu.memory_space<vmem>>, vector<1x2x128xf32>,
    %c0_23 = arith.constant 0 : index
    %c0_24 = arith.constant 0 : index
    %41 = vector.load %arg4[%c0_23, %c0_24] : memref<32x128xbf16, #tpu.memory_space<vmem>>, vector<32x128xbf16>
    %c0_25 = arith.constant 0 : index
    %c0_26 = arith.constant 0 : index
    %c0_27 = arith.constant 0 : index
    %42 = vector.load %arg7[%c0_25, %c0_26, %c0_27] : memref<1x2x32xf32, #tpu.memory_space<vmem>>, vector<1x2x32xf32>
    %43 = vector.shape_cast %42 : vector<1x2x32xf32> to vector<2x32xf32>
    %c0_28 = arith.constant 0 : index
    %c0_29 = arith.constant 0 : index
    %c0_30 = arith.constant 0 : index
    %44 = vector.load %arg8[%c0_28, %c0_29, %c0_30] : memref<1x2x32xf32, #tpu.memory_space<vmem>>, vector<1x2x32xf32>
    %45 = vector.shape_cast %44 : vector<1x2x32xf32> to vector<2x32xf32>
    %c0_i32_31 = arith.constant 0 : i32
    %46 = arith.index_cast %c0_i32_31 : i32 to index
    %c0_32 = arith.constant 0 : index
    %c0_33 = arith.constant 0 : index
    %47 = vector.load %arg6[%46, %c0_32, %c0_33] : memref<8x2x128xf32, #tpu.memory_space<vmem>>, vector<1x2x128xf32>
    %48 = vector.shape_cast %47 : vector<1x2x128xf32> to vector<2x128xf32>
    %49 = arith.truncf %43 : vector<2x32xf32> to vector<2x32xbf16>
    %cst_34 = arith.constant dense<0.000000e+00> : vector<2x128xf32>
    %50 = tpu.matmul %49, %41, %cst_34 {dimension_numbers = #tpu.dot_dimension_numbers<[1], [0], [0], [1], [0, 0, 1, 1], [], []>} : vector<2x32xbf16>, vector<32x128xbf16>, vector<2x128xf32> -> vector<2x128xf32>
    %51 = arith.addf %48, %50 : vector<2x128xf32>
    %52 = vector.extract_strided_slice %51 {offsets = [0, 0], sizes = [2, 96], strides = [1, 1]} : vector<2x128xf32> to vector<2x96xf32>
    %53 = arith.negf %52 : vector<2x96xf32>
    %54 = math.exp %53 : vector<2x96xf32>
    %cst_35 = arith.constant 1.000000e+00 : f32
    %55 = vector.broadcast %cst_35 : f32 to vector<2x96xf32>
    %56 = arith.addf %55, %54 : vector<2x96xf32>
    %57 = arith.divf %55, %56 : vector<2x96xf32>
    %58 = vector.extract_strided_slice %57 {offsets = [0, 0], sizes = [2, 32], strides = [1, 1]} : vector<2x96xf32> to vector<2x32xf32>
    %59 = vector.extract_strided_slice %57 {offsets = [0, 32], sizes = [2, 32], strides = [1, 1]} : vector<2x96xf32> to vector<2x32xf32>
    %60 = vector.extract_strided_slice %57 {offsets = [0, 64], sizes = [2, 32], strides = [1, 1]} : vector<2x96xf32> to vector<2x32xf32>
    %61 = vector.extract_strided_slice %51 {offsets = [0, 96], sizes = [2, 32], strides = [1, 1]} : vector<2x128xf32> to vector<2x32xf32>
    %62 = math.tanh %61 : vector<2x32xf32>
    %63 = arith.mulf %59, %45 : vector<2x32xf32>
    %64 = arith.mulf %58, %62 : vector<2x32xf32>
    %65 = arith.addf %63, %64 : vector<2x32xf32>
    %66 = math.tanh %65 : vector<2x32xf32>
    %67 = arith.mulf %60, %66 : vector<2x32xf32>
    %c1_i32 = arith.constant 1 : i32
    %68 = arith.index_cast %c1_i32 : i32 to index
    %c0_36 = arith.constant 0 : index
    %c0_37 = arith.constant 0 : index
    %69 = vector.load %arg6[%68, %c0_36, %c0_37] : memref<8x2x128xf32, #tpu.memory_space<vmem>>, vector<1x2x128xf32>
    %70 = vector.shape_cast %69 : vector<1x2x128xf32> to vector<2x128xf32>
    %71 = arith.truncf %67 : vector<2x32xf32> to vector<2x32xbf16>
    %cst_38 = arith.constant dense<0.000000e+00> : vector<2x128xf32>
    %72 = tpu.matmul %71, %41, %cst_38 {dimension_numbers = #tpu.dot_dimension_numbers<[1], [0], [0], [1], [0, 0, 1, 1], [], []>} : vector<2x32xbf16>, vector<32x128xbf16>, vector<2x128xf32> -> vector<2x128xf32>
    %73 = arith.addf %70, %72 : vector<2x128xf32>
    %74 = vector.extract_strided_slice %73 {offsets = [0, 0], sizes = [2, 96], strides = [1, 1]} : vector<2x128xf32> to vector<2x96xf32>
    %75 = arith.negf %74 : vector<2x96xf32>
    %76 = math.exp %75 : vector<2x96xf32>
    %cst_39 = arith.constant 1.000000e+00 : f32
    %77 = vector.broadcast %cst_39 : f32 to vector<2x96xf32>
    %78 = arith.addf %77, %76 : vector<2x96xf32>
    %79 = arith.divf %77, %78 : vector<2x96xf32>
    %80 = vector.extract_strided_slice %79 {offsets = [0, 0], sizes = [2, 32], strides = [1, 1]} : vector<2x96xf32> to vector<2x32xf32>
    %81 = vector.extract_strided_slice %79 {offsets = [0, 32], sizes = [2, 32], strides = [1, 1]} : vector<2x96xf32> to vector<2x32xf32>
    %82 = vector.extract_strided_slice %79 {offsets = [0, 64], sizes = [2, 32], strides = [1, 1]} : vector<2x96xf32> to vector<2x32xf32>
    %83 = vector.extract_strided_slice %73 {offsets = [0, 96], sizes = [2, 32], strides = [1, 1]} : vector<2x128xf32> to vector<2x32xf32>
    %84 = math.tanh %83 : vector<2x32xf32>
    %85 = arith.mulf %81, %65 : vector<2x32xf32>
    %86 = arith.mulf %80, %84 : vector<2x32xf32>
    %87 = arith.addf %85, %86 : vector<2x32xf32>
    %88 = math.tanh %87 : vector<2x32xf32>
    %89 = arith.mulf %82, %88 : vector<2x32xf32>
    %c2_i32 = arith.constant 2 : i32
    %90 = arith.index_cast %c2_i32 : i32 to index
    %c0_40 = arith.constant 0 : index
    %c0_41 = arith.constant 0 : index
    %91 = vector.load %arg6[%90, %c0_40, %c0_41] : memref<8x2x128xf32, #tpu.memory_space<vmem>>, vector<1x2x128xf32>
    %92 = vector.shape_cast %91 : vector<1x2x128xf32> to vector<2x128xf32>
    %93 = arith.truncf %89 : vector<2x32xf32> to vector<2x32xbf16>
    %cst_42 = arith.constant dense<0.000000e+00> : vector<2x128xf32>
    %94 = tpu.matmul %93, %41, %cst_42 {dimension_numbers = #tpu.dot_dimension_numbers<[1], [0], [0], [1], [0, 0, 1, 1], [], []>} : vector<2x32xbf16>, vector<32x128xbf16>, vector<2x128xf32> -> vector<2x128xf32>
    %95 = arith.addf %92, %94 : vector<2x128xf32>
    %96 = vector.extract_strided_slice %95 {offsets = [0, 0], sizes = [2, 96], strides = [1, 1]} : vector<2x128xf32> to vector<2x96xf32>
    %97 = arith.negf %96 : vector<2x96xf32>
    %98 = math.exp %97 : vector<2x96xf32>
    %cst_43 = arith.constant 1.000000e+00 : f32
    %99 = vector.broadcast %cst_43 : f32 to vector<2x96xf32>
    %100 = arith.addf %99, %98 : vector<2x96xf32>
    %101 = arith.divf %99, %100 : vector<2x96xf32>
    %102 = vector.extract_strided_slice %101 {offsets = [0, 0], sizes = [2, 32], strides = [1, 1]} : vector<2x96xf32> to vector<2x32xf32>
    %103 = vector.extract_strided_slice %101 {offsets = [0, 32], sizes = [2, 32], strides = [1, 1]} : vector<2x96xf32> to vector<2x32xf32>
    %104 = vector.extract_strided_slice %101 {offsets = [0, 64], sizes = [2, 32], strides = [1, 1]} : vector<2x96xf32> to vector<2x32xf32>
    %105 = vector.extract_strided_slice %95 {offsets = [0, 96], sizes = [2, 32], strides = [1, 1]} : vector<2x128xf32> to vector<2x32xf32>
    %106 = math.tanh %105 : vector<2x32xf32>
    %107 = arith.mulf %103, %87 : vector<2x32xf32>
    %108 = arith.mulf %102, %106 : vector<2x32xf32>
    %109 = arith.addf %107, %108 : vector<2x32xf32>
    %110 = math.tanh %109 : vector<2x32xf32>
    %111 = arith.mulf %104, %110 : vector<2x32xf32>
    %c3_i32 = arith.constant 3 : i32
    %112 = arith.index_cast %c3_i32 : i32 to index
    %c0_44 = arith.constant 0 : index
    %c0_45 = arith.constant 0 : index
    %113 = vector.load %arg6[%112, %c0_44, %c0_45] : memref<8x2x128xf32, #tpu.memory_space<vmem>>, vector<1x2x128xf32>
    %114 = vector.shape_cast %113 : vector<1x2x128xf32> to vector<2x128xf32>
    %115 = arith.truncf %111 : vector<2x32xf32> to vector<2x32xbf16>
    %cst_46 = arith.constant dense<0.000000e+00> : vector<2x128xf32>
    %116 = tpu.matmul %115, %41, %cst_46 {dimension_numbers = #tpu.dot_dimension_numbers<[1], [0], [0], [1], [0, 0, 1, 1], [], []>} : vector<2x32xbf16>, vector<32x128xbf16>, vector<2x128xf32> -> vector<2x128xf32>
    %117 = arith.addf %114, %116 : vector<2x128xf32>
    %118 = vector.extract_strided_slice %117 {offsets = [0, 0], sizes = [2, 96], strides = [1, 1]} : vector<2x128xf32> to vector<2x96xf32>
    %119 = arith.negf %118 : vector<2x96xf32>
    %120 = math.exp %119 : vector<2x96xf32>
    %cst_47 = arith.constant 1.000000e+00 : f32
    %121 = vector.broadcast %cst_47 : f32 to vector<2x96xf32>
    %122 = arith.addf %121, %120 : vector<2x96xf32>
    %123 = arith.divf %121, %122 : vector<2x96xf32>
    %124 = vector.extract_strided_slice %123 {offsets = [0, 0], sizes = [2, 32], strides = [1, 1]} : vector<2x96xf32> to vector<2x32xf32>
    %125 = vector.extract_strided_slice %123 {offsets = [0, 32], sizes = [2, 32], strides = [1, 1]} : vector<2x96xf32> to vector<2x32xf32>
    %126 = vector.extract_strided_slice %123 {offsets = [0, 64], sizes = [2, 32], strides = [1, 1]} : vector<2x96xf32> to vector<2x32xf32>
    %127 = vector.extract_strided_slice %117 {offsets = [0, 96], sizes = [2, 32], strides = [1, 1]} : vector<2x128xf32> to vector<2x32xf32>
    %128 = math.tanh %127 : vector<2x32xf32>
    %129 = arith.mulf %125, %109 : vector<2x32xf32>
    %130 = arith.mulf %124, %128 : vector<2x32xf32>
    %131 = arith.addf %129, %130 : vector<2x32xf32>
    %132 = math.tanh %131 : vector<2x32xf32>
    %133 = arith.mulf %126, %132 : vector<2x32xf32>
    %c4_i32 = arith.constant 4 : i32
    %134 = arith.index_cast %c4_i32 : i32 to index
    %c0_48 = arith.constant 0 : index
    %c0_49 = arith.constant 0 : index
    %135 = vector.load %arg6[%134, %c0_48, %c0_49] : memref<8x2x128xf32, #tpu.memory_space<vmem>>, vector<1x2x128xf32>
    %136 = vector.shape_cast %135 : vector<1x2x128xf32> to vector<2x128xf32>
    %137 = arith.truncf %133 : vector<2x32xf32> to vector<2x32xbf16>
    %cst_50 = arith.constant dense<0.000000e+00> : vector<2x128xf32>
    %138 = tpu.matmul %137, %41, %cst_50 {dimension_numbers = #tpu.dot_dimension_numbers<[1], [0], [0], [1], [0, 0, 1, 1], [], []>} : vector<2x32xbf16>, vector<32x128xbf16>, vector<2x128xf32> -> vector<2x128xf32>
    %139 = arith.addf %136, %138 : vector<2x128xf32>
    %140 = vector.extract_strided_slice %139 {offsets = [0, 0], sizes = [2, 96], strides = [1, 1]} : vector<2x128xf32> to vector<2x96xf32>
    %141 = arith.negf %140 : vector<2x96xf32>
    %142 = math.exp %141 : vector<2x96xf32>
    %cst_51 = arith.constant 1.000000e+00 : f32
    %143 = vector.broadcast %cst_51 : f32 to vector<2x96xf32>
    %144 = arith.addf %143, %142 : vector<2x96xf32>
    %145 = arith.divf %143, %144 : vector<2x96xf32>
    %146 = vector.extract_strided_slice %145 {offsets = [0, 0], sizes = [2, 32], strides = [1, 1]} : vector<2x96xf32> to vector<2x32xf32>
    %147 = vector.extract_strided_slice %145 {offsets = [0, 32], sizes = [2, 32], strides = [1, 1]} : vector<2x96xf32> to vector<2x32xf32>
    %148 = vector.extract_strided_slice %145 {offsets = [0, 64], sizes = [2, 32], strides = [1, 1]} : vector<2x96xf32> to vector<2x32xf32>
    %149 = vector.extract_strided_slice %139 {offsets = [0, 96], sizes = [2, 32], strides = [1, 1]} : vector<2x128xf32> to vector<2x32xf32>
    %150 = math.tanh %149 : vector<2x32xf32>
    %151 = arith.mulf %147, %131 : vector<2x32xf32>
    %152 = arith.mulf %146, %150 : vector<2x32xf32>
    %153 = arith.addf %151, %152 : vector<2x32xf32>
    %154 = math.tanh %153 : vector<2x32xf32>
    %155 = arith.mulf %148, %154 : vector<2x32xf32>
    %c5_i32 = arith.constant 5 : i32
    %156 = arith.index_cast %c5_i32 : i32 to index
    %c0_52 = arith.constant 0 : index
    %c0_53 = arith.constant 0 : index
    %157 = vector.load %arg6[%156, %c0_52, %c0_53] : memref<8x2x128xf32, #tpu.memory_space<vmem>>, vector<1x2x128xf32>
    %158 = vector.shape_cast %157 : vector<1x2x128xf32> to vector<2x128xf32>
    %159 = arith.truncf %155 : vector<2x32xf32> to vector<2x32xbf16>
    %cst_54 = arith.constant dense<0.000000e+00> : vector<2x128xf32>
    %160 = tpu.matmul %159, %41, %cst_54 {dimension_numbers = #tpu.dot_dimension_numbers<[1], [0], [0], [1], [0, 0, 1, 1], [], []>} : vector<2x32xbf16>, vector<32x128xbf16>, vector<2x128xf32> -> vector<2x128xf32>
    %161 = arith.addf %158, %160 : vector<2x128xf32>
    %162 = vector.extract_strided_slice %161 {offsets = [0, 0], sizes = [2, 96], strides = [1, 1]} : vector<2x128xf32> to vector<2x96xf32>
    %163 = arith.negf %162 : vector<2x96xf32>
    %164 = math.exp %163 : vector<2x96xf32>
    %cst_55 = arith.constant 1.000000e+00 : f32
    %165 = vector.broadcast %cst_55 : f32 to vector<2x96xf32>
    %166 = arith.addf %165, %164 : vector<2x96xf32>
    %167 = arith.divf %165, %166 : vector<2x96xf32>
    %168 = vector.extract_strided_slice %167 {offsets = [0, 0], sizes = [2, 32], strides = [1, 1]} : vector<2x96xf32> to vector<2x32xf32>
    %169 = vector.extract_strided_slice %167 {offsets = [0, 32], sizes = [2, 32], strides = [1, 1]} : vector<2x96xf32> to vector<2x32xf32>
    %170 = vector.extract_strided_slice %167 {offsets = [0, 64], sizes = [2, 32], strides = [1, 1]} : vector<2x96xf32> to vector<2x32xf32>
    %171 = vector.extract_strided_slice %161 {offsets = [0, 96], sizes = [2, 32], strides = [1, 1]} : vector<2x128xf32> to vector<2x32xf32>
    %172 = math.tanh %171 : vector<2x32xf32>
    %173 = arith.mulf %169, %153 : vector<2x32xf32>
    %174 = arith.mulf %168, %172 : vector<2x32xf32>
    %175 = arith.addf %173, %174 : vector<2x32xf32>
    %176 = math.tanh %175 : vector<2x32xf32>
    %177 = arith.mulf %170, %176 : vector<2x32xf32>
    %c6_i32 = arith.constant 6 : i32
    %178 = arith.index_cast %c6_i32 : i32 to index
    %c0_56 = arith.constant 0 : index
    %c0_57 = arith.constant 0 : index
    %179 = vector.load %arg6[%178, %c0_56, %c0_57] : memref<8x2x128xf32, #tpu.memory_space<vmem>>, vector<1x2x128xf32>
    %180 = vector.shape_cast %179 : vector<1x2x128xf32> to vector<2x128xf32>
    %181 = arith.truncf %177 : vector<2x32xf32> to vector<2x32xbf16>
    %cst_58 = arith.constant dense<0.000000e+00> : vector<2x128xf32>
    %182 = tpu.matmul %181, %41, %cst_58 {dimension_numbers = #tpu.dot_dimension_numbers<[1], [0], [0], [1], [0, 0, 1, 1], [], []>} : vector<2x32xbf16>, vector<32x128xbf16>, vector<2x128xf32> -> vector<2x128xf32>
    %183 = arith.addf %180, %182 : vector<2x128xf32>
    %184 = vector.extract_strided_slice %183 {offsets = [0, 0], sizes = [2, 96], strides = [1, 1]} : vector<2x128xf32> to vector<2x96xf32>
    %185 = arith.negf %184 : vector<2x96xf32>
    %186 = math.exp %185 : vector<2x96xf32>
    %cst_59 = arith.constant 1.000000e+00 : f32
    %187 = vector.broadcast %cst_59 : f32 to vector<2x96xf32>
    %188 = arith.addf %187, %186 : vector<2x96xf32>
    %189 = arith.divf %187, %188 : vector<2x96xf32>
    %190 = vector.extract_strided_slice %189 {offsets = [0, 0], sizes = [2, 32], strides = [1, 1]} : vector<2x96xf32> to vector<2x32xf32>
    %191 = vector.extract_strided_slice %189 {offsets = [0, 32], sizes = [2, 32], strides = [1, 1]} : vector<2x96xf32> to vector<2x32xf32>
    %192 = vector.extract_strided_slice %189 {offsets = [0, 64], sizes = [2, 32], strides = [1, 1]} : vector<2x96xf32> to vector<2x32xf32>
    %193 = vector.extract_strided_slice %183 {offsets = [0, 96], sizes = [2, 32], strides = [1, 1]} : vector<2x128xf32> to vector<2x32xf32>
    %194 = math.tanh %193 : vector<2x32xf32>
    %195 = arith.mulf %191, %175 : vector<2x32xf32>
    %196 = arith.mulf %190, %194 : vector<2x32xf32>
    %197 = arith.addf %195, %196 : vector<2x32xf32>
    %198 = math.tanh %197 : vector<2x32xf32>
    %199 = arith.mulf %192, %198 : vector<2x32xf32>
    %c7_i32 = arith.constant 7 : i32
    %200 = arith.index_cast %c7_i32 : i32 to index
    %c0_60 = arith.constant 0 : index
    %c0_61 = arith.constant 0 : index
    %201 = vector.load %arg6[%200, %c0_60, %c0_61] : memref<8x2x128xf32, #tpu.memory_space<vmem>>, vector<1x2x128xf32>
    %202 = vector.shape_cast %201 : vector<1x2x128xf32> to vector<2x128xf32>
    %203 = arith.truncf %199 : vector<2x32xf32> to vector<2x32xbf16>
    %cst_62 = arith.constant dense<0.000000e+00> : vector<2x128xf32>
    %204 = tpu.matmul %203, %41, %cst_62 {dimension_numbers = #tpu.dot_dimension_numbers<[1], [0], [0], [1], [0, 0, 1, 1], [], []>} : vector<2x32xbf16>, vector<32x128xbf16>, vector<2x128xf32> -> vector<2x128xf32>
    %205 = arith.addf %202, %204 : vector<2x128xf32>
    %206 = vector.extract_strided_slice %205 {offsets = [0, 0], sizes = [2, 96], strides = [1, 1]} : vector<2x128xf32> to vector<2x96xf32>
    %207 = arith.negf %206 : vector<2x96xf32>
    %208 = math.exp %207 : vector<2x96xf32>
    %cst_63 = arith.constant 1.000000e+00 : f32
    %209 = vector.broadcast %cst_63 : f32 to vector<2x96xf32>
    %210 = arith.addf %209, %208 : vector<2x96xf32>
    %211 = arith.divf %209, %210 : vector<2x96xf32>
    %212 = vector.extract_strided_slice %211 {offsets = [0, 0], sizes = [2, 32], strides = [1, 1]} : vector<2x96xf32> to vector<2x32xf32>
    %213 = vector.extract_strided_slice %211 {offsets = [0, 32], sizes = [2, 32], strides = [1, 1]} : vector<2x96xf32> to vector<2x32xf32>
    %214 = vector.extract_strided_slice %211 {offsets = [0, 64], sizes = [2, 32], strides = [1, 1]} : vector<2x96xf32> to vector<2x32xf32>
    %215 = vector.extract_strided_slice %205 {offsets = [0, 96], sizes = [2, 32], strides = [1, 1]} : vector<2x128xf32> to vector<2x32xf32>
    %216 = math.tanh %215 : vector<2x32xf32>
    %217 = arith.mulf %213, %197 : vector<2x32xf32>
    %218 = arith.mulf %212, %216 : vector<2x32xf32>
    %219 = arith.addf %217, %218 : vector<2x32xf32>
    %220 = math.tanh %219 : vector<2x32xf32>
    %221 = arith.mulf %214, %220 : vector<2x32xf32>
    %c8_i32 = arith.constant 8 : i32
    %c0_64 = arith.constant 0 : index
    %c0_65 = arith.constant 0 : index
    %c0_66 = arith.constant 0 : index
    %222 = vector.load %arg7[%c0_64, %c0_65, %c0_66] : memref<1x2x32xf32, #tpu.memory_space<vmem>>, vector<1x2x32xf32>
    %223 = vector.shape_cast %222 : vector<1x2x32xf32> to vector<2x32xf32>
    %224 = vector.shape_cast %221 : vector<2x32xf32> to vector<1x2x32xf32>
    tpu.vector_store %arg7[%c0_64, %c0_65, %c0_66], %224 {strides = array<i32>} : memref<1x2x32xf32, #tpu.memory_space<vmem>>, vector<1x2x32xf32>,
    %c0_67 = arith.constant 0 : index
    %c0_68 = arith.constant 0 : index
    %c0_69 = arith.constant 0 : index
    %225 = vector.load %arg8[%c0_67, %c0_68, %c0_69] : memref<1x2x32xf32, #tpu.memory_space<vmem>>, vector<1x2x32xf32>
    %226 = vector.shape_cast %225 : vector<1x2x32xf32> to vector<2x32xf32>
    %227 = vector.shape_cast %219 : vector<2x32xf32> to vector<1x2x32xf32>
    tpu.vector_store %arg8[%c0_67, %c0_68, %c0_69], %227 {strides = array<i32>} : memref<1x2x32xf32, #tpu.memory_space<vmem>>, vector<1x2x32xf32>,
    %c0_70 = arith.constant 0 : index
    %c0_71 = arith.constant 0 : index
    %228 = vector.load %arg5[%c0_70, %c0_71] : memref<2x32xf32, #tpu.memory_space<vmem>>, vector<2x32xf32>
    tpu.vector_store %arg5[%c0_70, %c0_71], %221 {strides = array<i32>} : memref<2x32xf32, #tpu.memory_space<vmem>>, vector<2x32xf32>,
    return
  }
  func.func @transform_0(%arg0: i32) -> (i32, i32) {
    %c0_i32 = arith.constant 0 : i32
    %c0_i32_0 = arith.constant 0 : i32
    return %arg0, %c0_i32 : i32, i32
  }
  func.func @transform_1(%arg0: i32) -> (i32, i32) {
    %c0_i32 = arith.constant 0 : i32
    %c0_i32_0 = arith.constant 0 : i32
    %c0_i32_1 = arith.constant 0 : i32
    return %c0_i32, %c0_i32_0 : i32, i32
  }
  func.func @transform_2(%arg0: i32) -> (i32, i32) {
    %c0_i32 = arith.constant 0 : i32
    %c0_i32_0 = arith.constant 0 : i32
    %c0_i32_1 = arith.constant 0 : i32
    return %c0_i32, %c0_i32_0 : i32, i32
  }
  func.func @transform_3(%arg0: i32) -> (i32, i32) {
    %c0_i32 = arith.constant 0 : i32
    %c0_i32_0 = arith.constant 0 : i32
    %c0_i32_1 = arith.constant 0 : i32
    return %c0_i32, %c0_i32_0 : i32, i32
  }
  func.func @transform_4(%arg0: i32) -> (i32, i32) {
    %c0_i32 = arith.constant 0 : i32
    %c0_i32_0 = arith.constant 0 : i32
    %c0_i32_1 = arith.constant 0 : i32
    return %c0_i32, %c0_i32_0 : i32, i32
  }
}

module attributes {stable_mosaic.version = 11 : i64} {
  func.func @_lstm_layer_kernel(%arg0: i32, %arg1: memref<16x16xbf16, #tpu.memory_space<vmem>>, %arg2: memref<16x128xbf16, #tpu.memory_space<vmem>>, %arg3: memref<1x128xf32, #tpu.memory_space<vmem>>, %arg4: memref<32x128xbf16, #tpu.memory_space<vmem>>, %arg5: memref<8x2x32xbf16, #tpu.memory_space<vmem>>, %arg6: memref<8x2x128xf32, #tpu.memory_space<vmem>>, %arg7: memref<1x2x32xf32, #tpu.memory_space<vmem>>, %arg8: memref<1x2x32xf32, #tpu.memory_space<vmem>>) attributes {dimension_semantics = [#tpu.dimension_semantics<arbitrary>], iteration_bounds = array<i64: 1>, scalar_prefetch = 0 : i64, scratch_operands = 3 : i64, tpu.core_type = #tpu.core_type<tc>, window_params = [{transform_indices = @transform_0, window_bounds = array<i64: 16, 16>}, {pipeline_mode = #tpu.pipeline_mode<synchronous>, transform_indices = @transform_1, window_bounds = array<i64: 16, 128>}, {pipeline_mode = #tpu.pipeline_mode<synchronous>, transform_indices = @transform_2, window_bounds = array<i64: 1, 128>}, {pipeline_mode = #tpu.pipeline_mode<synchronous>, transform_indices = @transform_3, window_bounds = array<i64: 32, 128>}, {transform_indices = @transform_4, window_bounds = array<i64: 8, 2, 32>}]} {
    %c0_i32 = arith.constant 0 : i32
    %0 = arith.cmpi eq, %arg0, %c0_i32 : i32
    %1 = arith.extui %0 : i1 to i32
    %c0_i32_0 = arith.constant 0 : i32
    %2 = arith.cmpi ne, %1, %c0_i32_0 : i32
    scf.if %2 {
      %cst_86 = arith.constant 0.000000e+00 : f32
      %268 = vector.broadcast %cst_86 : f32 to vector<1x2x32xf32>
      %c0_87 = arith.constant 0 : index
      %c0_88 = arith.constant 0 : index
      %c0_89 = arith.constant 0 : index
      %269 = vector.load %arg7[%c0_87, %c0_88, %c0_89] : memref<1x2x32xf32, #tpu.memory_space<vmem>>, vector<1x2x32xf32>
      tpu.vector_store %arg7[%c0_87, %c0_88, %c0_89], %268 {strides = array<i32>} : memref<1x2x32xf32, #tpu.memory_space<vmem>>, vector<1x2x32xf32>,
      %cst_90 = arith.constant 0.000000e+00 : f32
      %270 = vector.broadcast %cst_90 : f32 to vector<1x2x32xf32>
      %c0_91 = arith.constant 0 : index
      %c0_92 = arith.constant 0 : index
      %c0_93 = arith.constant 0 : index
      %271 = vector.load %arg8[%c0_91, %c0_92, %c0_93] : memref<1x2x32xf32, #tpu.memory_space<vmem>>, vector<1x2x32xf32>
      tpu.vector_store %arg8[%c0_91, %c0_92, %c0_93], %270 {strides = array<i32>} : memref<1x2x32xf32, #tpu.memory_space<vmem>>, vector<1x2x32xf32>,
    } else {
    }
    %c0 = arith.constant 0 : index
    %c0_1 = arith.constant 0 : index
    %3 = vector.load %arg1[%c0, %c0_1] : memref<16x16xbf16, #tpu.memory_space<vmem>>, vector<16x16xbf16>
    %c0_2 = arith.constant 0 : index
    %c0_3 = arith.constant 0 : index
    %4 = vector.load %arg2[%c0_2, %c0_3] : memref<16x128xbf16, #tpu.memory_space<vmem>>, vector<16x128xbf16>
    %cst = arith.constant dense<0.000000e+00> : vector<16x128xf32>
    %5 = tpu.matmul %3, %4, %cst {dimension_numbers = #tpu.dot_dimension_numbers<[1], [0], [0], [1], [0, 0, 1, 1], [], []>} : vector<16x16xbf16>, vector<16x128xbf16>, vector<16x128xf32> -> vector<16x128xf32>
    %c0_4 = arith.constant 0 : index
    %c0_5 = arith.constant 0 : index
    %6 = vector.load %arg3[%c0_4, %c0_5] : memref<1x128xf32, #tpu.memory_space<vmem>>, vector<1x128xf32>
    %7 = vector.broadcast %6 : vector<1x128xf32> to vector<16x128xf32>
    %8 = arith.addf %5, %7 : vector<16x128xf32>
    %9 = vector.extract_strided_slice %8 {offsets = [0, 0], sizes = [2, 128], strides = [1, 1]} : vector<16x128xf32> to vector<2x128xf32>
    %c0_6 = arith.constant 0 : index
    %c0_7 = arith.constant 0 : index
    %c0_8 = arith.constant 0 : index
    %10 = vector.load %arg6[%c0_6, %c0_7, %c0_8] : memref<8x2x128xf32, #tpu.memory_space<vmem>>, vector<1x2x128xf32>
    %11 = vector.shape_cast %10 : vector<1x2x128xf32> to vector<2x128xf32>
    %12 = vector.shape_cast %9 : vector<2x128xf32> to vector<1x2x128xf32>
    tpu.vector_store %arg6[%c0_6, %c0_7, %c0_8], %12 {strides = array<i32>} : memref<8x2x128xf32, #tpu.memory_space<vmem>>, vector<1x2x128xf32>,
    %13 = vector.extract_strided_slice %8 {offsets = [2, 0], sizes = [2, 128], strides = [1, 1]} : vector<16x128xf32> to vector<2x128xf32>
    %c1 = arith.constant 1 : index
    %c0_9 = arith.constant 0 : index
    %c0_10 = arith.constant 0 : index
    %14 = vector.load %arg6[%c1, %c0_9, %c0_10] : memref<8x2x128xf32, #tpu.memory_space<vmem>>, vector<1x2x128xf32>
    %15 = vector.shape_cast %14 : vector<1x2x128xf32> to vector<2x128xf32>
    %16 = vector.shape_cast %13 : vector<2x128xf32> to vector<1x2x128xf32>
    tpu.vector_store %arg6[%c1, %c0_9, %c0_10], %16 {strides = array<i32>} : memref<8x2x128xf32, #tpu.memory_space<vmem>>, vector<1x2x128xf32>,
    %17 = vector.extract_strided_slice %8 {offsets = [4, 0], sizes = [2, 128], strides = [1, 1]} : vector<16x128xf32> to vector<2x128xf32>
    %c2 = arith.constant 2 : index
    %c0_11 = arith.constant 0 : index
    %c0_12 = arith.constant 0 : index
    %18 = vector.load %arg6[%c2, %c0_11, %c0_12] : memref<8x2x128xf32, #tpu.memory_space<vmem>>, vector<1x2x128xf32>
    %19 = vector.shape_cast %18 : vector<1x2x128xf32> to vector<2x128xf32>
    %20 = vector.shape_cast %17 : vector<2x128xf32> to vector<1x2x128xf32>
    tpu.vector_store %arg6[%c2, %c0_11, %c0_12], %20 {strides = array<i32>} : memref<8x2x128xf32, #tpu.memory_space<vmem>>, vector<1x2x128xf32>,
    %21 = vector.extract_strided_slice %8 {offsets = [6, 0], sizes = [2, 128], strides = [1, 1]} : vector<16x128xf32> to vector<2x128xf32>
    %c3 = arith.constant 3 : index
    %c0_13 = arith.constant 0 : index
    %c0_14 = arith.constant 0 : index
    %22 = vector.load %arg6[%c3, %c0_13, %c0_14] : memref<8x2x128xf32, #tpu.memory_space<vmem>>, vector<1x2x128xf32>
    %23 = vector.shape_cast %22 : vector<1x2x128xf32> to vector<2x128xf32>
    %24 = vector.shape_cast %21 : vector<2x128xf32> to vector<1x2x128xf32>
    tpu.vector_store %arg6[%c3, %c0_13, %c0_14], %24 {strides = array<i32>} : memref<8x2x128xf32, #tpu.memory_space<vmem>>, vector<1x2x128xf32>,
    %25 = vector.extract_strided_slice %8 {offsets = [8, 0], sizes = [2, 128], strides = [1, 1]} : vector<16x128xf32> to vector<2x128xf32>
    %c4 = arith.constant 4 : index
    %c0_15 = arith.constant 0 : index
    %c0_16 = arith.constant 0 : index
    %26 = vector.load %arg6[%c4, %c0_15, %c0_16] : memref<8x2x128xf32, #tpu.memory_space<vmem>>, vector<1x2x128xf32>
    %27 = vector.shape_cast %26 : vector<1x2x128xf32> to vector<2x128xf32>
    %28 = vector.shape_cast %25 : vector<2x128xf32> to vector<1x2x128xf32>
    tpu.vector_store %arg6[%c4, %c0_15, %c0_16], %28 {strides = array<i32>} : memref<8x2x128xf32, #tpu.memory_space<vmem>>, vector<1x2x128xf32>,
    %29 = vector.extract_strided_slice %8 {offsets = [10, 0], sizes = [2, 128], strides = [1, 1]} : vector<16x128xf32> to vector<2x128xf32>
    %c5 = arith.constant 5 : index
    %c0_17 = arith.constant 0 : index
    %c0_18 = arith.constant 0 : index
    %30 = vector.load %arg6[%c5, %c0_17, %c0_18] : memref<8x2x128xf32, #tpu.memory_space<vmem>>, vector<1x2x128xf32>
    %31 = vector.shape_cast %30 : vector<1x2x128xf32> to vector<2x128xf32>
    %32 = vector.shape_cast %29 : vector<2x128xf32> to vector<1x2x128xf32>
    tpu.vector_store %arg6[%c5, %c0_17, %c0_18], %32 {strides = array<i32>} : memref<8x2x128xf32, #tpu.memory_space<vmem>>, vector<1x2x128xf32>,
    %33 = vector.extract_strided_slice %8 {offsets = [12, 0], sizes = [2, 128], strides = [1, 1]} : vector<16x128xf32> to vector<2x128xf32>
    %c6 = arith.constant 6 : index
    %c0_19 = arith.constant 0 : index
    %c0_20 = arith.constant 0 : index
    %34 = vector.load %arg6[%c6, %c0_19, %c0_20] : memref<8x2x128xf32, #tpu.memory_space<vmem>>, vector<1x2x128xf32>
    %35 = vector.shape_cast %34 : vector<1x2x128xf32> to vector<2x128xf32>
    %36 = vector.shape_cast %33 : vector<2x128xf32> to vector<1x2x128xf32>
    tpu.vector_store %arg6[%c6, %c0_19, %c0_20], %36 {strides = array<i32>} : memref<8x2x128xf32, #tpu.memory_space<vmem>>, vector<1x2x128xf32>,
    %37 = vector.extract_strided_slice %8 {offsets = [14, 0], sizes = [2, 128], strides = [1, 1]} : vector<16x128xf32> to vector<2x128xf32>
    %c7 = arith.constant 7 : index
    %c0_21 = arith.constant 0 : index
    %c0_22 = arith.constant 0 : index
    %38 = vector.load %arg6[%c7, %c0_21, %c0_22] : memref<8x2x128xf32, #tpu.memory_space<vmem>>, vector<1x2x128xf32>
    %39 = vector.shape_cast %38 : vector<1x2x128xf32> to vector<2x128xf32>
    %40 = vector.shape_cast %37 : vector<2x128xf32> to vector<1x2x128xf32>
    tpu.vector_store %arg6[%c7, %c0_21, %c0_22], %40 {strides = array<i32>} : memref<8x2x128xf32, #tpu.memory_space<vmem>>, vector<1x2x128xf32>,
    %c0_23 = arith.constant 0 : index
    %c0_24 = arith.constant 0 : index
    %41 = vector.load %arg4[%c0_23, %c0_24] : memref<32x128xbf16, #tpu.memory_space<vmem>>, vector<32x128xbf16>
    %c0_25 = arith.constant 0 : index
    %c0_26 = arith.constant 0 : index
    %c0_27 = arith.constant 0 : index
    %42 = vector.load %arg7[%c0_25, %c0_26, %c0_27] : memref<1x2x32xf32, #tpu.memory_space<vmem>>, vector<1x2x32xf32>
    %43 = vector.shape_cast %42 : vector<1x2x32xf32> to vector<2x32xf32>
    %c0_28 = arith.constant 0 : index
    %c0_29 = arith.constant 0 : index
    %c0_30 = arith.constant 0 : index
    %44 = vector.load %arg8[%c0_28, %c0_29, %c0_30] : memref<1x2x32xf32, #tpu.memory_space<vmem>>, vector<1x2x32xf32>
    %45 = vector.shape_cast %44 : vector<1x2x32xf32> to vector<2x32xf32>
    %c0_i32_31 = arith.constant 0 : i32
    %46 = arith.index_cast %c0_i32_31 : i32 to index
    %c0_32 = arith.constant 0 : index
    %c0_33 = arith.constant 0 : index
    %47 = vector.load %arg6[%46, %c0_32, %c0_33] : memref<8x2x128xf32, #tpu.memory_space<vmem>>, vector<1x2x128xf32>
    %48 = vector.shape_cast %47 : vector<1x2x128xf32> to vector<2x128xf32>
    %49 = arith.truncf %43 : vector<2x32xf32> to vector<2x32xbf16>
    %cst_34 = arith.constant dense<0.000000e+00> : vector<2x128xf32>
    %50 = tpu.matmul %49, %41, %cst_34 {dimension_numbers = #tpu.dot_dimension_numbers<[1], [0], [0], [1], [0, 0, 1, 1], [], []>} : vector<2x32xbf16>, vector<32x128xbf16>, vector<2x128xf32> -> vector<2x128xf32>
    %51 = arith.addf %48, %50 : vector<2x128xf32>
    %52 = vector.extract_strided_slice %51 {offsets = [0, 0], sizes = [2, 96], strides = [1, 1]} : vector<2x128xf32> to vector<2x96xf32>
    %53 = arith.negf %52 : vector<2x96xf32>
    %54 = math.exp %53 : vector<2x96xf32>
    %cst_35 = arith.constant 1.000000e+00 : f32
    %55 = vector.broadcast %cst_35 : f32 to vector<2x96xf32>
    %56 = arith.addf %55, %54 : vector<2x96xf32>
    %57 = arith.divf %55, %56 : vector<2x96xf32>
    %58 = vector.extract_strided_slice %57 {offsets = [0, 0], sizes = [2, 32], strides = [1, 1]} : vector<2x96xf32> to vector<2x32xf32>
    %59 = vector.extract_strided_slice %57 {offsets = [0, 32], sizes = [2, 32], strides = [1, 1]} : vector<2x96xf32> to vector<2x32xf32>
    %60 = vector.extract_strided_slice %57 {offsets = [0, 64], sizes = [2, 32], strides = [1, 1]} : vector<2x96xf32> to vector<2x32xf32>
    %61 = vector.extract_strided_slice %51 {offsets = [0, 96], sizes = [2, 32], strides = [1, 1]} : vector<2x128xf32> to vector<2x32xf32>
    %62 = math.tanh %61 : vector<2x32xf32>
    %63 = arith.mulf %59, %45 : vector<2x32xf32>
    %64 = arith.mulf %58, %62 : vector<2x32xf32>
    %65 = arith.addf %63, %64 : vector<2x32xf32>
    %66 = math.tanh %65 : vector<2x32xf32>
    %67 = arith.mulf %60, %66 : vector<2x32xf32>
    %68 = arith.truncf %67 : vector<2x32xf32> to vector<2x32xbf16>
    %69 = arith.index_cast %c0_i32_31 : i32 to index
    %c0_36 = arith.constant 0 : index
    %c0_37 = arith.constant 0 : index
    %70 = vector.load %arg5[%69, %c0_36, %c0_37] : memref<8x2x32xbf16, #tpu.memory_space<vmem>>, vector<1x2x32xbf16>
    %71 = vector.shape_cast %70 : vector<1x2x32xbf16> to vector<2x32xbf16>
    %72 = vector.shape_cast %68 : vector<2x32xbf16> to vector<1x2x32xbf16>
    tpu.vector_store %arg5[%69, %c0_36, %c0_37], %72 {strides = array<i32>} : memref<8x2x32xbf16, #tpu.memory_space<vmem>>, vector<1x2x32xbf16>,
    %c1_i32 = arith.constant 1 : i32
    %73 = arith.index_cast %c1_i32 : i32 to index
    %c0_38 = arith.constant 0 : index
    %c0_39 = arith.constant 0 : index
    %74 = vector.load %arg6[%73, %c0_38, %c0_39] : memref<8x2x128xf32, #tpu.memory_space<vmem>>, vector<1x2x128xf32>
    %75 = vector.shape_cast %74 : vector<1x2x128xf32> to vector<2x128xf32>
    %76 = arith.truncf %67 : vector<2x32xf32> to vector<2x32xbf16>
    %cst_40 = arith.constant dense<0.000000e+00> : vector<2x128xf32>
    %77 = tpu.matmul %76, %41, %cst_40 {dimension_numbers = #tpu.dot_dimension_numbers<[1], [0], [0], [1], [0, 0, 1, 1], [], []>} : vector<2x32xbf16>, vector<32x128xbf16>, vector<2x128xf32> -> vector<2x128xf32>
    %78 = arith.addf %75, %77 : vector<2x128xf32>
    %79 = vector.extract_strided_slice %78 {offsets = [0, 0], sizes = [2, 96], strides = [1, 1]} : vector<2x128xf32> to vector<2x96xf32>
    %80 = arith.negf %79 : vector<2x96xf32>
    %81 = math.exp %80 : vector<2x96xf32>
    %cst_41 = arith.constant 1.000000e+00 : f32
    %82 = vector.broadcast %cst_41 : f32 to vector<2x96xf32>
    %83 = arith.addf %82, %81 : vector<2x96xf32>
    %84 = arith.divf %82, %83 : vector<2x96xf32>
    %85 = vector.extract_strided_slice %84 {offsets = [0, 0], sizes = [2, 32], strides = [1, 1]} : vector<2x96xf32> to vector<2x32xf32>
    %86 = vector.extract_strided_slice %84 {offsets = [0, 32], sizes = [2, 32], strides = [1, 1]} : vector<2x96xf32> to vector<2x32xf32>
    %87 = vector.extract_strided_slice %84 {offsets = [0, 64], sizes = [2, 32], strides = [1, 1]} : vector<2x96xf32> to vector<2x32xf32>
    %88 = vector.extract_strided_slice %78 {offsets = [0, 96], sizes = [2, 32], strides = [1, 1]} : vector<2x128xf32> to vector<2x32xf32>
    %89 = math.tanh %88 : vector<2x32xf32>
    %90 = arith.mulf %86, %65 : vector<2x32xf32>
    %91 = arith.mulf %85, %89 : vector<2x32xf32>
    %92 = arith.addf %90, %91 : vector<2x32xf32>
    %93 = math.tanh %92 : vector<2x32xf32>
    %94 = arith.mulf %87, %93 : vector<2x32xf32>
    %95 = arith.truncf %94 : vector<2x32xf32> to vector<2x32xbf16>
    %96 = arith.index_cast %c1_i32 : i32 to index
    %c0_42 = arith.constant 0 : index
    %c0_43 = arith.constant 0 : index
    %97 = vector.load %arg5[%96, %c0_42, %c0_43] : memref<8x2x32xbf16, #tpu.memory_space<vmem>>, vector<1x2x32xbf16>
    %98 = vector.shape_cast %97 : vector<1x2x32xbf16> to vector<2x32xbf16>
    %99 = vector.shape_cast %95 : vector<2x32xbf16> to vector<1x2x32xbf16>
    tpu.vector_store %arg5[%96, %c0_42, %c0_43], %99 {strides = array<i32>} : memref<8x2x32xbf16, #tpu.memory_space<vmem>>, vector<1x2x32xbf16>,
    %c2_i32 = arith.constant 2 : i32
    %100 = arith.index_cast %c2_i32 : i32 to index
    %c0_44 = arith.constant 0 : index
    %c0_45 = arith.constant 0 : index
    %101 = vector.load %arg6[%100, %c0_44, %c0_45] : memref<8x2x128xf32, #tpu.memory_space<vmem>>, vector<1x2x128xf32>
    %102 = vector.shape_cast %101 : vector<1x2x128xf32> to vector<2x128xf32>
    %103 = arith.truncf %94 : vector<2x32xf32> to vector<2x32xbf16>
    %cst_46 = arith.constant dense<0.000000e+00> : vector<2x128xf32>
    %104 = tpu.matmul %103, %41, %cst_46 {dimension_numbers = #tpu.dot_dimension_numbers<[1], [0], [0], [1], [0, 0, 1, 1], [], []>} : vector<2x32xbf16>, vector<32x128xbf16>, vector<2x128xf32> -> vector<2x128xf32>
    %105 = arith.addf %102, %104 : vector<2x128xf32>
    %106 = vector.extract_strided_slice %105 {offsets = [0, 0], sizes = [2, 96], strides = [1, 1]} : vector<2x128xf32> to vector<2x96xf32>
    %107 = arith.negf %106 : vector<2x96xf32>
    %108 = math.exp %107 : vector<2x96xf32>
    %cst_47 = arith.constant 1.000000e+00 : f32
    %109 = vector.broadcast %cst_47 : f32 to vector<2x96xf32>
    %110 = arith.addf %109, %108 : vector<2x96xf32>
    %111 = arith.divf %109, %110 : vector<2x96xf32>
    %112 = vector.extract_strided_slice %111 {offsets = [0, 0], sizes = [2, 32], strides = [1, 1]} : vector<2x96xf32> to vector<2x32xf32>
    %113 = vector.extract_strided_slice %111 {offsets = [0, 32], sizes = [2, 32], strides = [1, 1]} : vector<2x96xf32> to vector<2x32xf32>
    %114 = vector.extract_strided_slice %111 {offsets = [0, 64], sizes = [2, 32], strides = [1, 1]} : vector<2x96xf32> to vector<2x32xf32>
    %115 = vector.extract_strided_slice %105 {offsets = [0, 96], sizes = [2, 32], strides = [1, 1]} : vector<2x128xf32> to vector<2x32xf32>
    %116 = math.tanh %115 : vector<2x32xf32>
    %117 = arith.mulf %113, %92 : vector<2x32xf32>
    %118 = arith.mulf %112, %116 : vector<2x32xf32>
    %119 = arith.addf %117, %118 : vector<2x32xf32>
    %120 = math.tanh %119 : vector<2x32xf32>
    %121 = arith.mulf %114, %120 : vector<2x32xf32>
    %122 = arith.truncf %121 : vector<2x32xf32> to vector<2x32xbf16>
    %123 = arith.index_cast %c2_i32 : i32 to index
    %c0_48 = arith.constant 0 : index
    %c0_49 = arith.constant 0 : index
    %124 = vector.load %arg5[%123, %c0_48, %c0_49] : memref<8x2x32xbf16, #tpu.memory_space<vmem>>, vector<1x2x32xbf16>
    %125 = vector.shape_cast %124 : vector<1x2x32xbf16> to vector<2x32xbf16>
    %126 = vector.shape_cast %122 : vector<2x32xbf16> to vector<1x2x32xbf16>
    tpu.vector_store %arg5[%123, %c0_48, %c0_49], %126 {strides = array<i32>} : memref<8x2x32xbf16, #tpu.memory_space<vmem>>, vector<1x2x32xbf16>,
    %c3_i32 = arith.constant 3 : i32
    %127 = arith.index_cast %c3_i32 : i32 to index
    %c0_50 = arith.constant 0 : index
    %c0_51 = arith.constant 0 : index
    %128 = vector.load %arg6[%127, %c0_50, %c0_51] : memref<8x2x128xf32, #tpu.memory_space<vmem>>, vector<1x2x128xf32>
    %129 = vector.shape_cast %128 : vector<1x2x128xf32> to vector<2x128xf32>
    %130 = arith.truncf %121 : vector<2x32xf32> to vector<2x32xbf16>
    %cst_52 = arith.constant dense<0.000000e+00> : vector<2x128xf32>
    %131 = tpu.matmul %130, %41, %cst_52 {dimension_numbers = #tpu.dot_dimension_numbers<[1], [0], [0], [1], [0, 0, 1, 1], [], []>} : vector<2x32xbf16>, vector<32x128xbf16>, vector<2x128xf32> -> vector<2x128xf32>
    %132 = arith.addf %129, %131 : vector<2x128xf32>
    %133 = vector.extract_strided_slice %132 {offsets = [0, 0], sizes = [2, 96], strides = [1, 1]} : vector<2x128xf32> to vector<2x96xf32>
    %134 = arith.negf %133 : vector<2x96xf32>
    %135 = math.exp %134 : vector<2x96xf32>
    %cst_53 = arith.constant 1.000000e+00 : f32
    %136 = vector.broadcast %cst_53 : f32 to vector<2x96xf32>
    %137 = arith.addf %136, %135 : vector<2x96xf32>
    %138 = arith.divf %136, %137 : vector<2x96xf32>
    %139 = vector.extract_strided_slice %138 {offsets = [0, 0], sizes = [2, 32], strides = [1, 1]} : vector<2x96xf32> to vector<2x32xf32>
    %140 = vector.extract_strided_slice %138 {offsets = [0, 32], sizes = [2, 32], strides = [1, 1]} : vector<2x96xf32> to vector<2x32xf32>
    %141 = vector.extract_strided_slice %138 {offsets = [0, 64], sizes = [2, 32], strides = [1, 1]} : vector<2x96xf32> to vector<2x32xf32>
    %142 = vector.extract_strided_slice %132 {offsets = [0, 96], sizes = [2, 32], strides = [1, 1]} : vector<2x128xf32> to vector<2x32xf32>
    %143 = math.tanh %142 : vector<2x32xf32>
    %144 = arith.mulf %140, %119 : vector<2x32xf32>
    %145 = arith.mulf %139, %143 : vector<2x32xf32>
    %146 = arith.addf %144, %145 : vector<2x32xf32>
    %147 = math.tanh %146 : vector<2x32xf32>
    %148 = arith.mulf %141, %147 : vector<2x32xf32>
    %149 = arith.truncf %148 : vector<2x32xf32> to vector<2x32xbf16>
    %150 = arith.index_cast %c3_i32 : i32 to index
    %c0_54 = arith.constant 0 : index
    %c0_55 = arith.constant 0 : index
    %151 = vector.load %arg5[%150, %c0_54, %c0_55] : memref<8x2x32xbf16, #tpu.memory_space<vmem>>, vector<1x2x32xbf16>
    %152 = vector.shape_cast %151 : vector<1x2x32xbf16> to vector<2x32xbf16>
    %153 = vector.shape_cast %149 : vector<2x32xbf16> to vector<1x2x32xbf16>
    tpu.vector_store %arg5[%150, %c0_54, %c0_55], %153 {strides = array<i32>} : memref<8x2x32xbf16, #tpu.memory_space<vmem>>, vector<1x2x32xbf16>,
    %c4_i32 = arith.constant 4 : i32
    %154 = arith.index_cast %c4_i32 : i32 to index
    %c0_56 = arith.constant 0 : index
    %c0_57 = arith.constant 0 : index
    %155 = vector.load %arg6[%154, %c0_56, %c0_57] : memref<8x2x128xf32, #tpu.memory_space<vmem>>, vector<1x2x128xf32>
    %156 = vector.shape_cast %155 : vector<1x2x128xf32> to vector<2x128xf32>
    %157 = arith.truncf %148 : vector<2x32xf32> to vector<2x32xbf16>
    %cst_58 = arith.constant dense<0.000000e+00> : vector<2x128xf32>
    %158 = tpu.matmul %157, %41, %cst_58 {dimension_numbers = #tpu.dot_dimension_numbers<[1], [0], [0], [1], [0, 0, 1, 1], [], []>} : vector<2x32xbf16>, vector<32x128xbf16>, vector<2x128xf32> -> vector<2x128xf32>
    %159 = arith.addf %156, %158 : vector<2x128xf32>
    %160 = vector.extract_strided_slice %159 {offsets = [0, 0], sizes = [2, 96], strides = [1, 1]} : vector<2x128xf32> to vector<2x96xf32>
    %161 = arith.negf %160 : vector<2x96xf32>
    %162 = math.exp %161 : vector<2x96xf32>
    %cst_59 = arith.constant 1.000000e+00 : f32
    %163 = vector.broadcast %cst_59 : f32 to vector<2x96xf32>
    %164 = arith.addf %163, %162 : vector<2x96xf32>
    %165 = arith.divf %163, %164 : vector<2x96xf32>
    %166 = vector.extract_strided_slice %165 {offsets = [0, 0], sizes = [2, 32], strides = [1, 1]} : vector<2x96xf32> to vector<2x32xf32>
    %167 = vector.extract_strided_slice %165 {offsets = [0, 32], sizes = [2, 32], strides = [1, 1]} : vector<2x96xf32> to vector<2x32xf32>
    %168 = vector.extract_strided_slice %165 {offsets = [0, 64], sizes = [2, 32], strides = [1, 1]} : vector<2x96xf32> to vector<2x32xf32>
    %169 = vector.extract_strided_slice %159 {offsets = [0, 96], sizes = [2, 32], strides = [1, 1]} : vector<2x128xf32> to vector<2x32xf32>
    %170 = math.tanh %169 : vector<2x32xf32>
    %171 = arith.mulf %167, %146 : vector<2x32xf32>
    %172 = arith.mulf %166, %170 : vector<2x32xf32>
    %173 = arith.addf %171, %172 : vector<2x32xf32>
    %174 = math.tanh %173 : vector<2x32xf32>
    %175 = arith.mulf %168, %174 : vector<2x32xf32>
    %176 = arith.truncf %175 : vector<2x32xf32> to vector<2x32xbf16>
    %177 = arith.index_cast %c4_i32 : i32 to index
    %c0_60 = arith.constant 0 : index
    %c0_61 = arith.constant 0 : index
    %178 = vector.load %arg5[%177, %c0_60, %c0_61] : memref<8x2x32xbf16, #tpu.memory_space<vmem>>, vector<1x2x32xbf16>
    %179 = vector.shape_cast %178 : vector<1x2x32xbf16> to vector<2x32xbf16>
    %180 = vector.shape_cast %176 : vector<2x32xbf16> to vector<1x2x32xbf16>
    tpu.vector_store %arg5[%177, %c0_60, %c0_61], %180 {strides = array<i32>} : memref<8x2x32xbf16, #tpu.memory_space<vmem>>, vector<1x2x32xbf16>,
    %c5_i32 = arith.constant 5 : i32
    %181 = arith.index_cast %c5_i32 : i32 to index
    %c0_62 = arith.constant 0 : index
    %c0_63 = arith.constant 0 : index
    %182 = vector.load %arg6[%181, %c0_62, %c0_63] : memref<8x2x128xf32, #tpu.memory_space<vmem>>, vector<1x2x128xf32>
    %183 = vector.shape_cast %182 : vector<1x2x128xf32> to vector<2x128xf32>
    %184 = arith.truncf %175 : vector<2x32xf32> to vector<2x32xbf16>
    %cst_64 = arith.constant dense<0.000000e+00> : vector<2x128xf32>
    %185 = tpu.matmul %184, %41, %cst_64 {dimension_numbers = #tpu.dot_dimension_numbers<[1], [0], [0], [1], [0, 0, 1, 1], [], []>} : vector<2x32xbf16>, vector<32x128xbf16>, vector<2x128xf32> -> vector<2x128xf32>
    %186 = arith.addf %183, %185 : vector<2x128xf32>
    %187 = vector.extract_strided_slice %186 {offsets = [0, 0], sizes = [2, 96], strides = [1, 1]} : vector<2x128xf32> to vector<2x96xf32>
    %188 = arith.negf %187 : vector<2x96xf32>
    %189 = math.exp %188 : vector<2x96xf32>
    %cst_65 = arith.constant 1.000000e+00 : f32
    %190 = vector.broadcast %cst_65 : f32 to vector<2x96xf32>
    %191 = arith.addf %190, %189 : vector<2x96xf32>
    %192 = arith.divf %190, %191 : vector<2x96xf32>
    %193 = vector.extract_strided_slice %192 {offsets = [0, 0], sizes = [2, 32], strides = [1, 1]} : vector<2x96xf32> to vector<2x32xf32>
    %194 = vector.extract_strided_slice %192 {offsets = [0, 32], sizes = [2, 32], strides = [1, 1]} : vector<2x96xf32> to vector<2x32xf32>
    %195 = vector.extract_strided_slice %192 {offsets = [0, 64], sizes = [2, 32], strides = [1, 1]} : vector<2x96xf32> to vector<2x32xf32>
    %196 = vector.extract_strided_slice %186 {offsets = [0, 96], sizes = [2, 32], strides = [1, 1]} : vector<2x128xf32> to vector<2x32xf32>
    %197 = math.tanh %196 : vector<2x32xf32>
    %198 = arith.mulf %194, %173 : vector<2x32xf32>
    %199 = arith.mulf %193, %197 : vector<2x32xf32>
    %200 = arith.addf %198, %199 : vector<2x32xf32>
    %201 = math.tanh %200 : vector<2x32xf32>
    %202 = arith.mulf %195, %201 : vector<2x32xf32>
    %203 = arith.truncf %202 : vector<2x32xf32> to vector<2x32xbf16>
    %204 = arith.index_cast %c5_i32 : i32 to index
    %c0_66 = arith.constant 0 : index
    %c0_67 = arith.constant 0 : index
    %205 = vector.load %arg5[%204, %c0_66, %c0_67] : memref<8x2x32xbf16, #tpu.memory_space<vmem>>, vector<1x2x32xbf16>
    %206 = vector.shape_cast %205 : vector<1x2x32xbf16> to vector<2x32xbf16>
    %207 = vector.shape_cast %203 : vector<2x32xbf16> to vector<1x2x32xbf16>
    tpu.vector_store %arg5[%204, %c0_66, %c0_67], %207 {strides = array<i32>} : memref<8x2x32xbf16, #tpu.memory_space<vmem>>, vector<1x2x32xbf16>,
    %c6_i32 = arith.constant 6 : i32
    %208 = arith.index_cast %c6_i32 : i32 to index
    %c0_68 = arith.constant 0 : index
    %c0_69 = arith.constant 0 : index
    %209 = vector.load %arg6[%208, %c0_68, %c0_69] : memref<8x2x128xf32, #tpu.memory_space<vmem>>, vector<1x2x128xf32>
    %210 = vector.shape_cast %209 : vector<1x2x128xf32> to vector<2x128xf32>
    %211 = arith.truncf %202 : vector<2x32xf32> to vector<2x32xbf16>
    %cst_70 = arith.constant dense<0.000000e+00> : vector<2x128xf32>
    %212 = tpu.matmul %211, %41, %cst_70 {dimension_numbers = #tpu.dot_dimension_numbers<[1], [0], [0], [1], [0, 0, 1, 1], [], []>} : vector<2x32xbf16>, vector<32x128xbf16>, vector<2x128xf32> -> vector<2x128xf32>
    %213 = arith.addf %210, %212 : vector<2x128xf32>
    %214 = vector.extract_strided_slice %213 {offsets = [0, 0], sizes = [2, 96], strides = [1, 1]} : vector<2x128xf32> to vector<2x96xf32>
    %215 = arith.negf %214 : vector<2x96xf32>
    %216 = math.exp %215 : vector<2x96xf32>
    %cst_71 = arith.constant 1.000000e+00 : f32
    %217 = vector.broadcast %cst_71 : f32 to vector<2x96xf32>
    %218 = arith.addf %217, %216 : vector<2x96xf32>
    %219 = arith.divf %217, %218 : vector<2x96xf32>
    %220 = vector.extract_strided_slice %219 {offsets = [0, 0], sizes = [2, 32], strides = [1, 1]} : vector<2x96xf32> to vector<2x32xf32>
    %221 = vector.extract_strided_slice %219 {offsets = [0, 32], sizes = [2, 32], strides = [1, 1]} : vector<2x96xf32> to vector<2x32xf32>
    %222 = vector.extract_strided_slice %219 {offsets = [0, 64], sizes = [2, 32], strides = [1, 1]} : vector<2x96xf32> to vector<2x32xf32>
    %223 = vector.extract_strided_slice %213 {offsets = [0, 96], sizes = [2, 32], strides = [1, 1]} : vector<2x128xf32> to vector<2x32xf32>
    %224 = math.tanh %223 : vector<2x32xf32>
    %225 = arith.mulf %221, %200 : vector<2x32xf32>
    %226 = arith.mulf %220, %224 : vector<2x32xf32>
    %227 = arith.addf %225, %226 : vector<2x32xf32>
    %228 = math.tanh %227 : vector<2x32xf32>
    %229 = arith.mulf %222, %228 : vector<2x32xf32>
    %230 = arith.truncf %229 : vector<2x32xf32> to vector<2x32xbf16>
    %231 = arith.index_cast %c6_i32 : i32 to index
    %c0_72 = arith.constant 0 : index
    %c0_73 = arith.constant 0 : index
    %232 = vector.load %arg5[%231, %c0_72, %c0_73] : memref<8x2x32xbf16, #tpu.memory_space<vmem>>, vector<1x2x32xbf16>
    %233 = vector.shape_cast %232 : vector<1x2x32xbf16> to vector<2x32xbf16>
    %234 = vector.shape_cast %230 : vector<2x32xbf16> to vector<1x2x32xbf16>
    tpu.vector_store %arg5[%231, %c0_72, %c0_73], %234 {strides = array<i32>} : memref<8x2x32xbf16, #tpu.memory_space<vmem>>, vector<1x2x32xbf16>,
    %c7_i32 = arith.constant 7 : i32
    %235 = arith.index_cast %c7_i32 : i32 to index
    %c0_74 = arith.constant 0 : index
    %c0_75 = arith.constant 0 : index
    %236 = vector.load %arg6[%235, %c0_74, %c0_75] : memref<8x2x128xf32, #tpu.memory_space<vmem>>, vector<1x2x128xf32>
    %237 = vector.shape_cast %236 : vector<1x2x128xf32> to vector<2x128xf32>
    %238 = arith.truncf %229 : vector<2x32xf32> to vector<2x32xbf16>
    %cst_76 = arith.constant dense<0.000000e+00> : vector<2x128xf32>
    %239 = tpu.matmul %238, %41, %cst_76 {dimension_numbers = #tpu.dot_dimension_numbers<[1], [0], [0], [1], [0, 0, 1, 1], [], []>} : vector<2x32xbf16>, vector<32x128xbf16>, vector<2x128xf32> -> vector<2x128xf32>
    %240 = arith.addf %237, %239 : vector<2x128xf32>
    %241 = vector.extract_strided_slice %240 {offsets = [0, 0], sizes = [2, 96], strides = [1, 1]} : vector<2x128xf32> to vector<2x96xf32>
    %242 = arith.negf %241 : vector<2x96xf32>
    %243 = math.exp %242 : vector<2x96xf32>
    %cst_77 = arith.constant 1.000000e+00 : f32
    %244 = vector.broadcast %cst_77 : f32 to vector<2x96xf32>
    %245 = arith.addf %244, %243 : vector<2x96xf32>
    %246 = arith.divf %244, %245 : vector<2x96xf32>
    %247 = vector.extract_strided_slice %246 {offsets = [0, 0], sizes = [2, 32], strides = [1, 1]} : vector<2x96xf32> to vector<2x32xf32>
    %248 = vector.extract_strided_slice %246 {offsets = [0, 32], sizes = [2, 32], strides = [1, 1]} : vector<2x96xf32> to vector<2x32xf32>
    %249 = vector.extract_strided_slice %246 {offsets = [0, 64], sizes = [2, 32], strides = [1, 1]} : vector<2x96xf32> to vector<2x32xf32>
    %250 = vector.extract_strided_slice %240 {offsets = [0, 96], sizes = [2, 32], strides = [1, 1]} : vector<2x128xf32> to vector<2x32xf32>
    %251 = math.tanh %250 : vector<2x32xf32>
    %252 = arith.mulf %248, %227 : vector<2x32xf32>
    %253 = arith.mulf %247, %251 : vector<2x32xf32>
    %254 = arith.addf %252, %253 : vector<2x32xf32>
    %255 = math.tanh %254 : vector<2x32xf32>
    %256 = arith.mulf %249, %255 : vector<2x32xf32>
    %257 = arith.truncf %256 : vector<2x32xf32> to vector<2x32xbf16>
    %258 = arith.index_cast %c7_i32 : i32 to index
    %c0_78 = arith.constant 0 : index
    %c0_79 = arith.constant 0 : index
    %259 = vector.load %arg5[%258, %c0_78, %c0_79] : memref<8x2x32xbf16, #tpu.memory_space<vmem>>, vector<1x2x32xbf16>
    %260 = vector.shape_cast %259 : vector<1x2x32xbf16> to vector<2x32xbf16>
    %261 = vector.shape_cast %257 : vector<2x32xbf16> to vector<1x2x32xbf16>
    tpu.vector_store %arg5[%258, %c0_78, %c0_79], %261 {strides = array<i32>} : memref<8x2x32xbf16, #tpu.memory_space<vmem>>, vector<1x2x32xbf16>,
    %c8_i32 = arith.constant 8 : i32
    %c0_80 = arith.constant 0 : index
    %c0_81 = arith.constant 0 : index
    %c0_82 = arith.constant 0 : index
    %262 = vector.load %arg7[%c0_80, %c0_81, %c0_82] : memref<1x2x32xf32, #tpu.memory_space<vmem>>, vector<1x2x32xf32>
    %263 = vector.shape_cast %262 : vector<1x2x32xf32> to vector<2x32xf32>
    %264 = vector.shape_cast %256 : vector<2x32xf32> to vector<1x2x32xf32>
    tpu.vector_store %arg7[%c0_80, %c0_81, %c0_82], %264 {strides = array<i32>} : memref<1x2x32xf32, #tpu.memory_space<vmem>>, vector<1x2x32xf32>,
    %c0_83 = arith.constant 0 : index
    %c0_84 = arith.constant 0 : index
    %c0_85 = arith.constant 0 : index
    %265 = vector.load %arg8[%c0_83, %c0_84, %c0_85] : memref<1x2x32xf32, #tpu.memory_space<vmem>>, vector<1x2x32xf32>
    %266 = vector.shape_cast %265 : vector<1x2x32xf32> to vector<2x32xf32>
    %267 = vector.shape_cast %254 : vector<2x32xf32> to vector<1x2x32xf32>
    tpu.vector_store %arg8[%c0_83, %c0_84, %c0_85], %267 {strides = array<i32>} : memref<1x2x32xf32, #tpu.memory_space<vmem>>, vector<1x2x32xf32>,
    return
  }
  func.func @transform_0(%arg0: i32) -> (i32, i32) {
    %c0_i32 = arith.constant 0 : i32
    %c0_i32_0 = arith.constant 0 : i32
    return %arg0, %c0_i32 : i32, i32
  }
  func.func @transform_1(%arg0: i32) -> (i32, i32) {
    %c0_i32 = arith.constant 0 : i32
    %c0_i32_0 = arith.constant 0 : i32
    %c0_i32_1 = arith.constant 0 : i32
    return %c0_i32, %c0_i32_0 : i32, i32
  }
  func.func @transform_2(%arg0: i32) -> (i32, i32) {
    %c0_i32 = arith.constant 0 : i32
    %c0_i32_0 = arith.constant 0 : i32
    %c0_i32_1 = arith.constant 0 : i32
    return %c0_i32, %c0_i32_0 : i32, i32
  }
  func.func @transform_3(%arg0: i32) -> (i32, i32) {
    %c0_i32 = arith.constant 0 : i32
    %c0_i32_0 = arith.constant 0 : i32
    %c0_i32_1 = arith.constant 0 : i32
    return %c0_i32, %c0_i32_0 : i32, i32
  }
  func.func @transform_4(%arg0: i32) -> (i32, i32, i32) {
    %c0_i32 = arith.constant 0 : i32
    %c0_i32_0 = arith.constant 0 : i32
    %c0_i32_1 = arith.constant 0 : i32
    return %arg0, %c0_i32, %c0_i32_0 : i32, i32, i32
  }
}

module attributes {stable_mosaic.version = 11 : i64} {
  func.func @_matmul_bias_kernel(%arg0: i32, %arg1: memref<2x32xf32, #tpu.memory_space<vmem>>, %arg2: memref<32x8xf32, #tpu.memory_space<vmem>>, %arg3: memref<1x8xf32, #tpu.memory_space<vmem>>, %arg4: memref<2x8xf32, #tpu.memory_space<vmem>>) attributes {dimension_semantics = [#tpu.dimension_semantics<parallel>], iteration_bounds = array<i64: 1>, scalar_prefetch = 0 : i64, scratch_operands = 0 : i64, tpu.core_type = #tpu.core_type<tc>, window_params = [{transform_indices = @transform_0, window_bounds = array<i64: 2, 32>}, {pipeline_mode = #tpu.pipeline_mode<synchronous>, transform_indices = @transform_1, window_bounds = array<i64: 32, 8>}, {pipeline_mode = #tpu.pipeline_mode<synchronous>, transform_indices = @transform_2, window_bounds = array<i64: 1, 8>}, {transform_indices = @transform_3, window_bounds = array<i64: 2, 8>}]} {
    %c0 = arith.constant 0 : index
    %c0_0 = arith.constant 0 : index
    %0 = vector.load %arg1[%c0, %c0_0] : memref<2x32xf32, #tpu.memory_space<vmem>>, vector<2x32xf32>
    %c0_1 = arith.constant 0 : index
    %c0_2 = arith.constant 0 : index
    %1 = vector.load %arg2[%c0_1, %c0_2] : memref<32x8xf32, #tpu.memory_space<vmem>>, vector<32x8xf32>
    %cst = arith.constant dense<0.000000e+00> : vector<2x8xf32>
    %2 = tpu.matmul %0, %1, %cst {dimension_numbers = #tpu.dot_dimension_numbers<[1], [0], [0], [1], [0, 0, 1, 1], [], []>} : vector<2x32xf32>, vector<32x8xf32>, vector<2x8xf32> -> vector<2x8xf32>
    %c0_3 = arith.constant 0 : index
    %c0_4 = arith.constant 0 : index
    %3 = vector.load %arg3[%c0_3, %c0_4] : memref<1x8xf32, #tpu.memory_space<vmem>>, vector<1x8xf32>
    %4 = vector.broadcast %3 : vector<1x8xf32> to vector<2x8xf32>
    %5 = arith.addf %2, %4 : vector<2x8xf32>
    %c0_5 = arith.constant 0 : index
    %c0_6 = arith.constant 0 : index
    %6 = vector.load %arg4[%c0_5, %c0_6] : memref<2x8xf32, #tpu.memory_space<vmem>>, vector<2x8xf32>
    tpu.vector_store %arg4[%c0_5, %c0_6], %5 {strides = array<i32>} : memref<2x8xf32, #tpu.memory_space<vmem>>, vector<2x8xf32>,
    return
  }
  func.func @transform_0(%arg0: i32) -> (i32, i32) {
    %c0_i32 = arith.constant 0 : i32
    %c0_i32_0 = arith.constant 0 : i32
    return %arg0, %c0_i32 : i32, i32
  }
  func.func @transform_1(%arg0: i32) -> (i32, i32) {
    %c0_i32 = arith.constant 0 : i32
    %c0_i32_0 = arith.constant 0 : i32
    %c0_i32_1 = arith.constant 0 : i32
    return %c0_i32, %c0_i32_0 : i32, i32
  }
  func.func @transform_2(%arg0: i32) -> (i32, i32) {
    %c0_i32 = arith.constant 0 : i32
    %c0_i32_0 = arith.constant 0 : i32
    %c0_i32_1 = arith.constant 0 : i32
    return %c0_i32, %c0_i32_0 : i32, i32
  }
  func.func @transform_3(%arg0: i32) -> (i32, i32) {
    %c0_i32 = arith.constant 0 : i32
    %c0_i32_0 = arith.constant 0 : i32
    return %arg0, %c0_i32 : i32, i32
  }
}

</mosaic_0001>

<llo_original>
// kernel: lstm_forward.5
$region0: #{lstm_forward.5}
  #allocation0 [shape = 'u32[]', space=smem, size = 0x4, offset = 0x4, fixed_abs, tag = 'smem constant byte address 0x4 - core index']
  #allocation1 [shape = 'u32[144,128]{1,0:T(1,128)}', space=vmem, size = 0x12000, scoped, tag = 'internal scratch']
  %s0 = inlined_call_operand.vmem [shape: f32[2,32], index: 0, kind: input, shape index: {}]
  %s1 = inlined_call_operand.vmem [shape: f32[32,8], index: 1, kind: input, shape index: {}]
  %s2 = inlined_call_operand.vmem [shape: f32[1,8], index: 2, kind: input, shape index: {}]
  %s3 = inlined_call_operand.hbm [shape: f32[2,8], index: 3, kind: output, shape index: {}]
  %s4 = sld [smem:[#allocation0]]
  $region22: #{lstm_forward.5} parent=0
    _
  %s6 = ssub.s32 1, %s4
  %s7 = scalar_select 0, %s6, %s4
  $region1: #{lstm_forward.5} parent=0
    #allocation2 [shape = 'u8[1024]{0}', space=vmem, size = 0x400, scoped, tag = 'output window, operand 0, single buffered']
    #allocation3 [shape = 's32[1]{0}', space=sflag, size = 0x4, scoped, tag = 'scoped memory for lstm_forward.5']
    %8 = vsyncpa [#allocation3], 0
    // Predicated region
    $region2: #{lstm_forward.5} parent=1 // pred_check
      _
    $region3: #{lstm_forward.5} parent=1 // pred_check_branch
      %10 = sbr.rel (0) target = $region5
    $region4: #{lstm_forward.5} parent=1 // pred_region
      _
    $region5: #{lstm_forward.5} parent=1 // pred_fallthru
      _
    // Predicated region
    $region6: #{lstm_forward.5} parent=1 // pred_check
      _
    $region7: #{lstm_forward.5} parent=1 // pred_check_branch
      %12 = sbr.rel (0) target = $region9
    $region8: #{lstm_forward.5} parent=1 // pred_region
      _
    $region9: #{lstm_forward.5} parent=1 // pred_fallthru
      _
    // Predicated region
    $region10: #{lstm_forward.5} parent=1 // pred_check
      _
    $region11: #{lstm_forward.5} parent=1 // pred_check_branch
      %14 = sbr.rel (0) target = $region13
    $region12: #{lstm_forward.5} parent=1 // pred_region
      _
    $region13: #{lstm_forward.5} parent=1 // pred_fallthru
      _
    %v15 = vld [vmem:[%s0] sm:$0x3]
    %v16 = vld [vmem:[%s1] sm:$0xff]
    %v17 = vld [vmem:[%s1 + $0x8] sm:$0xff]
    %v18 = vld [vmem:[%s1 + $0x10] sm:$0xff]
    %v19 = vld [vmem:[%s1 + $0x18] sm:$0xff]
    %v20 = vld [vmem:[%s2] sm:$0x1]
    %v22 = vlaneseq
    %v23 = vshrl.u32 %v22, 7
    %v24 = vsub.s32 0, %v23
    %v25 = vrot.slane %v20, %v24
    %vm27 = vcmask 261120
    %v29 = vsel %vm27, %v15, 0
    %31 = vmatprep.subr.mxu0 0.0
    %32 = vmatpush1.msra.mxu0 %v16
    %33 = vmatprep.subr.mxu0 0.0
    %34 = vmatpush1.msra.mxu0 %v17
    %35 = vmatprep.subr.mxu0 0.0
    %36 = vmatpush1.msra.mxu0 %v18
    %37 = vmatprep.subr.mxu0 0.0
    %38 = vmatpush1.msra.mxu0 %v19
    %39 = vmatprep.subr.mxu0 0.0
    %40 = vmatpush1.msra.mxu0 0.0
    %41 = vmatprep.subr.mxu0 0.0
    %42 = vmatpush1.msra.mxu0 0.0
    %43 = vmatprep.subr.mxu0 0.0
    %44 = vmatpush1.msra.mxu0 0.0
    %45 = vmatprep.subr.mxu0 0.0
    %46 = vmatpush1.msra.mxu0 0.0
    %47 = vmatprep.subr.mxu0 0.0
    %48 = vmatpush1.msra.mxu0 0.0
    %49 = vmatprep.subr.mxu0 0.0
    %50 = vmatpush1.msra.mxu0 0.0
    %51 = vmatprep.subr.mxu0 0.0
    %52 = vmatpush1.msra.mxu0 0.0
    %53 = vmatprep.subr.mxu0 0.0
    %54 = vmatpush1.msra.mxu0 0.0
    %55 = vmatprep.subr.mxu0 0.0
    %56 = vmatpush1.msra.mxu0 0.0
    %57 = vmatprep.subr.mxu0 0.0
    %58 = vmatpush1.msra.mxu0 0.0
    %59 = vmatprep.subr.mxu0 0.0
    %60 = vmatpush1.msra.mxu0 0.0
    %61 = vmatprep.subr.mxu0 0.0
    %62 = vmatpush1.msra.mxu0 0.0
    %63 = vmatprep.subr.mxu0 0.0
    %64 = vmatpush1.msra.mxu0 0.0
    %65 = vmatprep.subr.mxu0 0.0
    %66 = vmatpush1.msra.mxu0 0.0
    %67 = vmatprep.subr.mxu0 0.0
    %68 = vmatpush1.msra.mxu0 0.0
    %69 = vmatprep.subr.mxu0 0.0
    %70 = vmatpush1.msra.mxu0 0.0
    %71 = vmatprep.subr.mxu0 0.0
    %72 = vmatpush1.msra.mxu0 0.0
    %73 = vmatprep.subr.mxu0 0.0
    %74 = vmatpush1.msra.mxu0 0.0
    %75 = vmatprep.subr.mxu0 0.0
    %76 = vmatpush1.msra.mxu0 0.0
    %77 = vmatprep.subr.mxu0 0.0
    %78 = vmatpush1.msra.mxu0 0.0
    %79 = vmatprep.subr.mxu0 0.0
    %80 = vmatpush1.msra.mxu0 0.0
    %81 = vmatprep.subr.mxu0 0.0
    %82 = vmatpush1.msra.mxu0 0.0
    %83 = vmatprep.subr.mxu0 0.0
    %84 = vmatpush1.msra.mxu0 0.0
    %85 = vmatprep.subr.mxu0 0.0
    %86 = vmatpush1.msra.mxu0 0.0
    %87 = vmatprep.subr.mxu0 0.0
    %88 = vmatpush1.msra.mxu0 0.0
    %89 = vmatprep.subr.mxu0 0.0
    %90 = vmatpush1.msra.mxu0 0.0
    %91 = vmatprep.subr.mxu0 0.0
    %92 = vmatpush1.msra.mxu0 0.0
    %93 = vmatprep.subr.mxu0 0.0
    %94 = vmatpush1.msra.mxu0 0.0
    %95 = vmatprep.mubr.f32.mxu0 0.0
    %96 = vmatmul.mubr.f32.gmra.mrb[0].mxu0 %v29
    %v97 = vpop.f32.mrb[0].mxu0
    %v98 = vadd.f32 %v25, %v97
    %v99 = vpop.f32.mrb[0].mxu0
    %100 = vdwg.mxu0
    %vm101 = vcmask 58368
    %102 = vst.msk [vmem:[#allocation2] sm:$0x3] %vm101, %v98
    // Predicated region
    $region14: #{lstm_forward.5} parent=1 // pred_check
      _
    $region15: #{lstm_forward.5} parent=1 // pred_check_branch
      %104 = sbr.rel (0) target = $region17
    $region16: #{lstm_forward.5} parent=1 // pred_region
      %s106 = ssub.s32 32, 32
      %107 = vsyncadd [#allocation3], %s106
      %s109 = sshll.u32 [#allocation2], 4
      %s110 = int_to_ptr.vmem [resolvable:$true] %s109
      %112 = dma.vmem_to_hbm [thread:$0]  %s110, 32, %s3, [#allocation3]
    $region17: #{lstm_forward.5} parent=1 // pred_fallthru
      _
    // Predicated region
    $region18: #{lstm_forward.5} parent=1 // pred_check
      _
    $region19: #{lstm_forward.5} parent=1 // pred_check_branch
      %114 = sbr.rel (0) target = $region21
    $region20: #{lstm_forward.5} parent=1 // pred_region
      %115 = dma.done [#allocation3], 32
    $region21: #{lstm_forward.5} parent=1 // pred_fallthru
      _
    %116 = vsyncpa [#allocation3], 1

// kernel: lstm_forward.4
$region0: #{lstm_forward.4}
  #allocation0 [shape = 'u32[]', space=smem, size = 0x4, offset = 0x4, fixed_abs, tag = 'smem constant byte address 0x4 - core index']
  #allocation1 [shape = 'u32[144,128]{1,0:T(1,128)}', space=vmem, size = 0x12000, scoped, tag = 'internal scratch']
  #allocation2 [shape = 'f32[8,2,128]{2,1,0:T(2,128)}', space=vmem, size = 0x2000, scoped, tag = 'scratch operand']
  #allocation3 [shape = 'f32[1,2,32]{2,1,0:T(2,128)}', space=vmem, size = 0x400, scoped, tag = 'scratch operand']
  #allocation4 [shape = 'f32[1,2,32]{2,1,0:T(2,128)}', space=vmem, size = 0x400, scoped, tag = 'scratch operand']
  %s0 = inlined_call_operand.vmem [shape: bf16[16,32], index: 0, kind: input, shape index: {}]
  %s1 = inlined_call_operand.vmem [shape: bf16[32,128], index: 1, kind: input, shape index: {}]
  %s2 = inlined_call_operand.vmem [shape: f32[1,128], index: 2, kind: input, shape index: {}]
  %s3 = inlined_call_operand.vmem [shape: bf16[32,128], index: 3, kind: input, shape index: {}]
  %s4 = inlined_call_operand.vmem [shape: f32[2,32], index: 4, kind: output, shape index: {}]
  %s5 = sld [smem:[#allocation0]]
  $region30: #{lstm_forward.4} parent=0
    _
  %s7 = ssub.s32 1, %s5
  %s8 = scalar_select 0, %s7, %s5
  // Predicated region
  $region2: #{lstm_forward.4} parent=0 // pred_check
    _
  $region3: #{lstm_forward.4} parent=0 // pred_check_branch
    %10 = sbr.rel (0) target = $region5
  $region4: #{lstm_forward.4} parent=0 // pred_region
    _
  $region5: #{lstm_forward.4} parent=0 // pred_fallthru
    _
  // Predicated region
  $region6: #{lstm_forward.4} parent=0 // pred_check
    _
  $region7: #{lstm_forward.4} parent=0 // pred_check_branch
    %12 = sbr.rel (0) target = $region9
  $region8: #{lstm_forward.4} parent=0 // pred_region
    _
  $region9: #{lstm_forward.4} parent=0 // pred_fallthru
    _
  // Predicated region
  $region10: #{lstm_forward.4} parent=0 // pred_check
    _
  $region11: #{lstm_forward.4} parent=0 // pred_check_branch
    %14 = sbr.rel (0) target = $region13
  $region12: #{lstm_forward.4} parent=0 // pred_region
    _
  $region13: #{lstm_forward.4} parent=0 // pred_fallthru
    _
  // Predicated region
  $region14: #{lstm_forward.4} parent=0 // pred_check
    _
  $region15: #{lstm_forward.4} parent=0 // pred_check_branch
    %16 = sbr.rel (0) target = $region17
  $region16: #{lstm_forward.4} parent=0 // pred_region
    _
  $region17: #{lstm_forward.4} parent=0 // pred_fallthru
    _
  %p18 = scmp.eq.s32.totalorder 0, 0
  // Predicated region
  $region18: #{lstm_forward.4} parent=0 // pred_check
    %p19 = pneg %p18
  $region19: #{lstm_forward.4} parent=0 // pred_check_branch
    %21 = sbr.rel (%p19) target = $region21
  $region20: #{lstm_forward.4} parent=0 // pred_region
    %vm22 = vcmask 254976
    %23 = vst.msk [vmem:[#allocation3] sm:$0x3] %vm22, 0.0
    %24 = vst.msk [vmem:[#allocation4] sm:$0x3] %vm22, 0.0
  $region21: #{lstm_forward.4} parent=0 // pred_fallthru
    _
  %v25 = vld [vmem:[%s0] sm:$0xf]
  %v26 = vld [vmem:[%s0 + $0x4] sm:$0xf]
  %v27 = vld [vmem:[%s1] sm:$0xf]
  %v28 = vld [vmem:[%s1 + $0x4] sm:$0xf]
  %v29 = vld [vmem:[%s1 + $0x8] sm:$0xf]
  %v30 = vld [vmem:[%s1 + $0xc] sm:$0xf]
  %v31 = vld [vmem:[%s2] sm:$0x1]
  %v33 = vlaneseq
  %v34 = vshrl.u32 %v33, 7
  %v35 = vsub.s32 0, %v34
  %v36 = vrot.slane %v31, %v35
  %v40 = vunpack.c.l.b16 %v25
  %v41 = vunpack.c.l.b16 %v26
  %v42 = vpack.c.b16 %v41, %v40
  %v47 = vunpack.c.l.b16 %v27
  %v48 = vunpack.c.l.b16 %v28
  %v49 = vunpack.c.l.b16 %v29
  %v50 = vunpack.c.l.b16 %v30
  %v51 = vpack.c.b16 %v48, %v47
  %v52 = vpack.c.b16 %v50, %v49
  %vm55 = vcmask 261120
  %v57 = vsel %vm55, %v42, 0
  %59 = vmatprep.subr.bf16.mxu0 0
  %60 = vmatpush1.bf16.msra.mxu0 %v51
  %61 = vmatprep.subr.bf16.mxu0 0
  %62 = vmatpush1.bf16.msra.mxu0 %v52
  %63 = vmatprep.subr.bf16.mxu0 0
  %64 = vmatpush1.bf16.msra.mxu0 0
  %65 = vmatprep.subr.bf16.mxu0 0
  %66 = vmatpush1.bf16.msra.mxu0 0
  %67 = vmatprep.subr.bf16.mxu0 0
  %68 = vmatpush1.bf16.msra.mxu0 0
  %69 = vmatprep.subr.bf16.mxu0 0
  %70 = vmatpush1.bf16.msra.mxu0 0
  %71 = vmatprep.subr.bf16.mxu0 0
  %72 = vmatpush1.bf16.msra.mxu0 0
  %73 = vmatprep.subr.bf16.mxu0 0
  %74 = vmatpush1.bf16.msra.mxu0 0
  %75 = vmatprep.subr.bf16.mxu0 0
  %76 = vmatpush1.bf16.msra.mxu0 0
  %77 = vmatprep.subr.bf16.mxu0 0
  %78 = vmatpush1.bf16.msra.mxu0 0
  %79 = vmatprep.subr.bf16.mxu0 0
  %80 = vmatpush1.bf16.msra.mxu0 0
  %81 = vmatprep.subr.bf16.mxu0 0
  %82 = vmatpush1.bf16.msra.mxu0 0
  %83 = vmatprep.subr.bf16.mxu0 0
  %84 = vmatpush1.bf16.msra.mxu0 0
  %85 = vmatprep.subr.bf16.mxu0 0
  %86 = vmatpush1.bf16.msra.mxu0 0
  %87 = vmatprep.subr.bf16.mxu0 0
  %88 = vmatpush1.bf16.msra.mxu0 0
  %89 = vmatprep.subr.bf16.mxu0 0
  %90 = vmatpush1.bf16.msra.mxu0 0
  %91 = vmatprep.mubr.bf16.mxu0 0
  %92 = vmatmul.mubr.bf16.gmra.mrb[0].mxu0 %v57
  %v93 = vpop.f32.mrb[0].mxu0
  %v94 = vadd.f32 %v36, %v93
  %v95 = vpop.f32.mrb[0].mxu0
  %v96 = vpop.f32.mrb[0].mxu0
  %v97 = vadd.f32 %v36, %v96
  %v98 = vpop.f32.mrb[0].mxu0
  %99 = vdwg.mxu0
  %100 = vst [vmem:[#allocation2] sm:$0x3] %v94
  %s101 = scalar_lea.vmem [#allocation2], 2
  %102 = vst [vmem:[%s101 - $0x2] sm:$0xc] %v94
  %s103 = scalar_lea.vmem [#allocation2], 4
  %104 = vst [vmem:[%s103 - $0x4] sm:$0x30] %v94
  %s105 = scalar_lea.vmem [#allocation2], 6
  %106 = vst [vmem:[%s105 - $0x6] sm:$0xc0] %v94
  %s107 = scalar_lea.vmem [#allocation2], 8
  %108 = vst [vmem:[%s107] sm:$0x3] %v97
  %s109 = scalar_lea.vmem [#allocation2], 10
  %110 = vst [vmem:[%s109 - $0x2] sm:$0xc] %v97
  %s111 = scalar_lea.vmem [#allocation2], 12
  %112 = vst [vmem:[%s111 - $0x4] sm:$0x30] %v97
  %s113 = scalar_lea.vmem [#allocation2], 14
  %114 = vst [vmem:[%s113 - $0x6] sm:$0xc0] %v97
  %v115 = vld [vmem:[%s3] sm:$0xf]
  %v116 = vld [vmem:[%s3 + $0x4] sm:$0xf]
  %v117 = vld [vmem:[%s3 + $0x8] sm:$0xf]
  %v118 = vld [vmem:[%s3 + $0xc] sm:$0xf]
  %v119 = vld [vmem:[#allocation3] sm:$0x3]
  %v120 = vld [vmem:[#allocation4] sm:$0x3]
  %v121 = vld [vmem:[#allocation2] sm:$0x3]
  %v122 = vpack.c.bf16 %v119, %v119
  %v127 = vunpack.c.l.b16 %v115
  %v128 = vunpack.c.l.b16 %v116
  %v129 = vunpack.c.l.b16 %v117
  %v130 = vunpack.c.l.b16 %v118
  %v131 = vpack.c.b16 %v128, %v127
  %v132 = vpack.c.b16 %v130, %v129
  %v136 = vsel %vm55, %v122, 0
  %138 = vmatprep.subr.bf16.mxu0 0
  %139 = vmatpush1.bf16.msra.mxu0 %v131
  %140 = vmatprep.subr.bf16.mxu0 0
  %141 = vmatpush1.bf16.msra.mxu0 %v132
  %142 = vmatprep.subr.bf16.mxu0 0
  %143 = vmatpush1.bf16.msra.mxu0 0
  %144 = vmatprep.subr.bf16.mxu0 0
  %145 = vmatpush1.bf16.msra.mxu0 0
  %146 = vmatprep.subr.bf16.mxu0 0
  %147 = vmatpush1.bf16.msra.mxu0 0
  %148 = vmatprep.subr.bf16.mxu0 0
  %149 = vmatpush1.bf16.msra.mxu0 0
  %150 = vmatprep.subr.bf16.mxu0 0
  %151 = vmatpush1.bf16.msra.mxu0 0
  %152 = vmatprep.subr.bf16.mxu0 0
  %153 = vmatpush1.bf16.msra.mxu0 0
  %154 = vmatprep.subr.bf16.mxu0 0
  %155 = vmatpush1.bf16.msra.mxu0 0
  %156 = vmatprep.subr.bf16.mxu0 0
  %157 = vmatpush1.bf16.msra.mxu0 0
  %158 = vmatprep.subr.bf16.mxu0 0
  %159 = vmatpush1.bf16.msra.mxu0 0
  %160 = vmatprep.subr.bf16.mxu0 0
  %161 = vmatpush1.bf16.msra.mxu0 0
  %162 = vmatprep.subr.bf16.mxu0 0
  %163 = vmatpush1.bf16.msra.mxu0 0
  %164 = vmatprep.subr.bf16.mxu0 0
  %165 = vmatpush1.bf16.msra.mxu0 0
  %166 = vmatprep.subr.bf16.mxu0 0
  %167 = vmatpush1.bf16.msra.mxu0 0
  %168 = vmatprep.subr.bf16.mxu0 0
  %169 = vmatpush1.bf16.msra.mxu0 0
  %170 = vmatprep.mubr.bf16.mxu0 0
  %171 = vmatmul.mubr.bf16.gmra.mrb[0].mxu0 %v136
  %v172 = vpop.f32.mrb[0].mxu0
  %v173 = vadd.f32 0.0, %v172
  %v174 = vpop.f32.mrb[0].mxu0
  %v175 = vpop.f32.mrb[0].mxu0
  %v176 = vpop.f32.mrb[0].mxu0
  %177 = vdwg.mxu0
  %v178 = vadd.f32 %v121, %v173
  %v179 = vxor.u32 %v178, 2147483648
  %v180 = vmul.f32 %v179, 1.442695
  %v181 = vpow.pop %v180
  %v182 = vadd.f32 %v181, 1.0
  %v183 = vrcp.pop %v182
  %v184 = vmul.f32 1.0, %v183
  %v185 = vtanh.pop %v178
  %187 = vrot.lane.b32.xlu0 %v120, 32
  %v188 = vpop.permute.xlu0 %187
  %v190 = vmul.f32 %v184, %v188
  %192 = vrot.lane.b32.xlu0 %v185, 32
  %v193 = vpop.permute.xlu0 %192
  %v195 = vmul.f32 %v184, %v193
  %197 = vrot.lane.b32.xlu0 %v195, 32
  %v198 = vpop.permute.xlu0 %197
  %v200 = vadd.f32 %v190, %v198
  %v201 = vtanh.pop %v200
  %203 = vrot.lane.b32.xlu0 %v201, 32
  %v204 = vpop.permute.xlu0 %203
  %v206 = vmul.f32 %v184, %v204
  %v207 = vld [vmem:[%s101] sm:$0x3]
  %v208 = vpack.c.bf16 %v206, %v206
  %210 = vrot.lane.b32.xlu0 %v208, 64
  %v211 = vpop.permute.xlu0 %210
  %v213 = vsel %vm55, %v211, 0
  %215 = vmatprep.subr.bf16.mxu0 0
  %216 = vmatpush1.bf16.msra.mxu0 %v131
  %217 = vmatprep.subr.bf16.mxu0 0
  %218 = vmatpush1.bf16.msra.mxu0 %v132
  %219 = vmatprep.subr.bf16.mxu0 0
  %220 = vmatpush1.bf16.msra.mxu0 0
  %221 = vmatprep.subr.bf16.mxu0 0
  %222 = vmatpush1.bf16.msra.mxu0 0
  %223 = vmatprep.subr.bf16.mxu0 0
  %224 = vmatpush1.bf16.msra.mxu0 0
  %225 = vmatprep.subr.bf16.mxu0 0
  %226 = vmatpush1.bf16.msra.mxu0 0
  %227 = vmatprep.subr.bf16.mxu0 0
  %228 = vmatpush1.bf16.msra.mxu0 0
  %229 = vmatprep.subr.bf16.mxu0 0
  %230 = vmatpush1.bf16.msra.mxu0 0
  %231 = vmatprep.subr.bf16.mxu0 0
  %232 = vmatpush1.bf16.msra.mxu0 0
  %233 = vmatprep.subr.bf16.mxu0 0
  %234 = vmatpush1.bf16.msra.mxu0 0
  %235 = vmatprep.subr.bf16.mxu0 0
  %236 = vmatpush1.bf16.msra.mxu0 0
  %237 = vmatprep.subr.bf16.mxu0 0
  %238 = vmatpush1.bf16.msra.mxu0 0
  %239 = vmatprep.subr.bf16.mxu0 0
  %240 = vmatpush1.bf16.msra.mxu0 0
  %241 = vmatprep.subr.bf16.mxu0 0
  %242 = vmatpush1.bf16.msra.mxu0 0
  %243 = vmatprep.subr.bf16.mxu0 0
  %244 = vmatpush1.bf16.msra.mxu0 0
  %245 = vmatprep.subr.bf16.mxu0 0
  %246 = vmatpush1.bf16.msra.mxu0 0
  %247 = vmatprep.mubr.bf16.mxu0 0
  %248 = vmatmul.mubr.bf16.gmra.mrb[0].mxu0 %v213
  %v249 = vpop.f32.mrb[0].mxu0
  %v250 = vadd.f32 0.0, %v249
  %v251 = vpop.f32.mrb[0].mxu0
  %v252 = vpop.f32.mrb[0].mxu0
  %v253 = vpop.f32.mrb[0].mxu0
  %254 = vdwg.mxu0
  %v255 = vadd.f32 %v207, %v250
  %v256 = vxor.u32 %v255, 2147483648
  %v257 = vmul.f32 %v256, 1.442695
  %v258 = vpow.pop %v257
  %v259 = vadd.f32 %v258, 1.0
  %v260 = vrcp.pop %v259
  %v261 = vmul.f32 1.0, %v260
  %v262 = vtanh.pop %v255
  %v263 = vmul.f32 %v261, %v200
  %265 = vrot.lane.b32.xlu0 %v262, 32
  %v266 = vpop.permute.xlu0 %265
  %v268 = vmul.f32 %v261, %v266
  %270 = vrot.lane.b32.xlu0 %v268, 32
  %v271 = vpop.permute.xlu0 %270
  %v273 = vadd.f32 %v263, %v271
  %v274 = vtanh.pop %v273
  %276 = vrot.lane.b32.xlu0 %v274, 32
  %v277 = vpop.permute.xlu0 %276
  %v279 = vmul.f32 %v261, %v277
  %v280 = vld [vmem:[%s103] sm:$0x3]
  %v281 = vpack.c.bf16 %v279, %v279
  %283 = vrot.lane.b32.xlu0 %v281, 64
  %v284 = vpop.permute.xlu0 %283
  %v286 = vsel %vm55, %v284, 0
  %288 = vmatprep.subr.bf16.mxu0 0
  %289 = vmatpush1.bf16.msra.mxu0 %v131
  %290 = vmatprep.subr.bf16.mxu0 0
  %291 = vmatpush1.bf16.msra.mxu0 %v132
  %292 = vmatprep.subr.bf16.mxu0 0
  %293 = vmatpush1.bf16.msra.mxu0 0
  %294 = vmatprep.subr.bf16.mxu0 0
  %295 = vmatpush1.bf16.msra.mxu0 0
  %296 = vmatprep.subr.bf16.mxu0 0
  %297 = vmatpush1.bf16.msra.mxu0 0
  %298 = vmatprep.subr.bf16.mxu0 0
  %299 = vmatpush1.bf16.msra.mxu0 0
  %300 = vmatprep.subr.bf16.mxu0 0
  %301 = vmatpush1.bf16.msra.mxu0 0
  %302 = vmatprep.subr.bf16.mxu0 0
  %303 = vmatpush1.bf16.msra.mxu0 0
  %304 = vmatprep.subr.bf16.mxu0 0
  %305 = vmatpush1.bf16.msra.mxu0 0
  %306 = vmatprep.subr.bf16.mxu0 0
  %307 = vmatpush1.bf16.msra.mxu0 0
  %308 = vmatprep.subr.bf16.mxu0 0
  %309 = vmatpush1.bf16.msra.mxu0 0
  %310 = vmatprep.subr.bf16.mxu0 0
  %311 = vmatpush1.bf16.msra.mxu0 0
  %312 = vmatprep.subr.bf16.mxu0 0
  %313 = vmatpush1.bf16.msra.mxu0 0
  %314 = vmatprep.subr.bf16.mxu0 0
  %315 = vmatpush1.bf16.msra.mxu0 0
  %316 = vmatprep.subr.bf16.mxu0 0
  %317 = vmatpush1.bf16.msra.mxu0 0
  %318 = vmatprep.subr.bf16.mxu0 0
  %319 = vmatpush1.bf16.msra.mxu0 0
  %320 = vmatprep.mubr.bf16.mxu0 0
  %321 = vmatmul.mubr.bf16.gmra.mrb[0].mxu0 %v286
  %v322 = vpop.f32.mrb[0].mxu0
  %v323 = vadd.f32 0.0, %v322
  %v324 = vpop.f32.mrb[0].mxu0
  %v325 = vpop.f32.mrb[0].mxu0
  %v326 = vpop.f32.mrb[0].mxu0
  %327 = vdwg.mxu0
  %v328 = vadd.f32 %v280, %v323
  %v329 = vxor.u32 %v328, 2147483648
  %v330 = vmul.f32 %v329, 1.442695
  %v331 = vpow.pop %v330
  %v332 = vadd.f32 %v331, 1.0
  %v333 = vrcp.pop %v332
  %v334 = vmul.f32 1.0, %v333
  %v335 = vtanh.pop %v328
  %v336 = vmul.f32 %v334, %v273
  %338 = vrot.lane.b32.xlu0 %v335, 32
  %v339 = vpop.permute.xlu0 %338
  %v341 = vmul.f32 %v334, %v339
  %343 = vrot.lane.b32.xlu0 %v341, 32
  %v344 = vpop.permute.xlu0 %343
  %v346 = vadd.f32 %v336, %v344
  %v347 = vtanh.pop %v346
  %349 = vrot.lane.b32.xlu0 %v347, 32
  %v350 = vpop.permute.xlu0 %349
  %v352 = vmul.f32 %v334, %v350
  %v353 = vld [vmem:[%s105] sm:$0x3]
  %v354 = vpack.c.bf16 %v352, %v352
  %356 = vrot.lane.b32.xlu0 %v354, 64
  %v357 = vpop.permute.xlu0 %356
  %v359 = vsel %vm55, %v357, 0
  %361 = vmatprep.subr.bf16.mxu0 0
  %362 = vmatpush1.bf16.msra.mxu0 %v131
  %363 = vmatprep.subr.bf16.mxu0 0
  %364 = vmatpush1.bf16.msra.mxu0 %v132
  %365 = vmatprep.subr.bf16.mxu0 0
  %366 = vmatpush1.bf16.msra.mxu0 0
  %367 = vmatprep.subr.bf16.mxu0 0
  %368 = vmatpush1.bf16.msra.mxu0 0
  %369 = vmatprep.subr.bf16.mxu0 0
  %370 = vmatpush1.bf16.msra.mxu0 0
  %371 = vmatprep.subr.bf16.mxu0 0
  %372 = vmatpush1.bf16.msra.mxu0 0
  %373 = vmatprep.subr.bf16.mxu0 0
  %374 = vmatpush1.bf16.msra.mxu0 0
  %375 = vmatprep.subr.bf16.mxu0 0
  %376 = vmatpush1.bf16.msra.mxu0 0
  %377 = vmatprep.subr.bf16.mxu0 0
  %378 = vmatpush1.bf16.msra.mxu0 0
  %379 = vmatprep.subr.bf16.mxu0 0
  %380 = vmatpush1.bf16.msra.mxu0 0
  %381 = vmatprep.subr.bf16.mxu0 0
  %382 = vmatpush1.bf16.msra.mxu0 0
  %383 = vmatprep.subr.bf16.mxu0 0
  %384 = vmatpush1.bf16.msra.mxu0 0
  %385 = vmatprep.subr.bf16.mxu0 0
  %386 = vmatpush1.bf16.msra.mxu0 0
  %387 = vmatprep.subr.bf16.mxu0 0
  %388 = vmatpush1.bf16.msra.mxu0 0
  %389 = vmatprep.subr.bf16.mxu0 0
  %390 = vmatpush1.bf16.msra.mxu0 0
  %391 = vmatprep.subr.bf16.mxu0 0
  %392 = vmatpush1.bf16.msra.mxu0 0
  %393 = vmatprep.mubr.bf16.mxu0 0
  %394 = vmatmul.mubr.bf16.gmra.mrb[0].mxu0 %v359
  %v395 = vpop.f32.mrb[0].mxu0
  %v396 = vadd.f32 0.0, %v395
  %v397 = vpop.f32.mrb[0].mxu0
  %v398 = vpop.f32.mrb[0].mxu0
  %v399 = vpop.f32.mrb[0].mxu0
  %400 = vdwg.mxu0
  %v401 = vadd.f32 %v353, %v396
  %v402 = vxor.u32 %v401, 2147483648
  %v403 = vmul.f32 %v402, 1.442695
  %v404 = vpow.pop %v403
  %v405 = vadd.f32 %v404, 1.0
  %v406 = vrcp.pop %v405
  %v407 = vmul.f32 1.0, %v406
  %v408 = vtanh.pop %v401
  %v409 = vmul.f32 %v407, %v346
  %411 = vrot.lane.b32.xlu0 %v408, 32
  %v412 = vpop.permute.xlu0 %411
  %v414 = vmul.f32 %v407, %v412
  %416 = vrot.lane.b32.xlu0 %v414, 32
  %v417 = vpop.permute.xlu0 %416
  %v419 = vadd.f32 %v409, %v417
  %v420 = vtanh.pop %v419
  %422 = vrot.lane.b32.xlu0 %v420, 32
  %v423 = vpop.permute.xlu0 %422
  %v425 = vmul.f32 %v407, %v423
  %v426 = vld [vmem:[%s107] sm:$0x3]
  %v427 = vpack.c.bf16 %v425, %v425
  %429 = vrot.lane.b32.xlu0 %v427, 64
  %v430 = vpop.permute.xlu0 %429
  %v432 = vsel %vm55, %v430, 0
  %434 = vmatprep.subr.bf16.mxu0 0
  %435 = vmatpush1.bf16.msra.mxu0 %v131
  %436 = vmatprep.subr.bf16.mxu0 0
  %437 = vmatpush1.bf16.msra.mxu0 %v132
  %438 = vmatprep.subr.bf16.mxu0 0
  %439 = vmatpush1.bf16.msra.mxu0 0
  %440 = vmatprep.subr.bf16.mxu0 0
  %441 = vmatpush1.bf16.msra.mxu0 0
  %442 = vmatprep.subr.bf16.mxu0 0
  %443 = vmatpush1.bf16.msra.mxu0 0
  %444 = vmatprep.subr.bf16.mxu0 0
  %445 = vmatpush1.bf16.msra.mxu0 0
  %446 = vmatprep.subr.bf16.mxu0 0
  %447 = vmatpush1.bf16.msra.mxu0 0
  %448 = vmatprep.subr.bf16.mxu0 0
  %449 = vmatpush1.bf16.msra.mxu0 0
  %450 = vmatprep.subr.bf16.mxu0 0
  %451 = vmatpush1.bf16.msra.mxu0 0
  %452 = vmatprep.subr.bf16.mxu0 0
  %453 = vmatpush1.bf16.msra.mxu0 0
  %454 = vmatprep.subr.bf16.mxu0 0
  %455 = vmatpush1.bf16.msra.mxu0 0
  %456 = vmatprep.subr.bf16.mxu0 0
  %457 = vmatpush1.bf16.msra.mxu0 0
  %458 = vmatprep.subr.bf16.mxu0 0
  %459 = vmatpush1.bf16.msra.mxu0 0
  %460 = vmatprep.subr.bf16.mxu0 0
  %461 = vmatpush1.bf16.msra.mxu0 0
  %462 = vmatprep.subr.bf16.mxu0 0
  %463 = vmatpush1.bf16.msra.mxu0 0
  %464 = vmatprep.subr.bf16.mxu0 0
  %465 = vmatpush1.bf16.msra.mxu0 0
  %466 = vmatprep.mubr.bf16.mxu0 0
  %467 = vmatmul.mubr.bf16.gmra.mrb[0].mxu0 %v432
  %v468 = vpop.f32.mrb[0].mxu0
  %v469 = vadd.f32 0.0, %v468
  %v470 = vpop.f32.mrb[0].mxu0
  %v471 = vpop.f32.mrb[0].mxu0
  %v472 = vpop.f32.mrb[0].mxu0
  %473 = vdwg.mxu0
  %v474 = vadd.f32 %v426, %v469
  %v475 = vxor.u32 %v474, 2147483648
  %v476 = vmul.f32 %v475, 1.442695
  %v477 = vpow.pop %v476
  %v478 = vadd.f32 %v477, 1.0
  %v479 = vrcp.pop %v478
  %v480 = vmul.f32 1.0, %v479
  %v481 = vtanh.pop %v474
  %v482 = vmul.f32 %v480, %v419
  %484 = vrot.lane.b32.xlu0 %v481, 32
  %v485 = vpop.permute.xlu0 %484
  %v487 = vmul.f32 %v480, %v485
  %489 = vrot.lane.b32.xlu0 %v487, 32
  %v490 = vpop.permute.xlu0 %489
  %v492 = vadd.f32 %v482, %v490
  %v493 = vtanh.pop %v492
  %495 = vrot.lane.b32.xlu0 %v493, 32
  %v496 = vpop.permute.xlu0 %495
  %v498 = vmul.f32 %v480, %v496
  %v499 = vld [vmem:[%s109] sm:$0x3]
  %v500 = vpack.c.bf16 %v498, %v498
  %502 = vrot.lane.b32.xlu0 %v500, 64
  %v503 = vpop.permute.xlu0 %502
  %v505 = vsel %vm55, %v503, 0
  %507 = vmatprep.subr.bf16.mxu0 0
  %508 = vmatpush1.bf16.msra.mxu0 %v131
  %509 = vmatprep.subr.bf16.mxu0 0
  %510 = vmatpush1.bf16.msra.mxu0 %v132
  %511 = vmatprep.subr.bf16.mxu0 0
  %512 = vmatpush1.bf16.msra.mxu0 0
  %513 = vmatprep.subr.bf16.mxu0 0
  %514 = vmatpush1.bf16.msra.mxu0 0
  %515 = vmatprep.subr.bf16.mxu0 0
  %516 = vmatpush1.bf16.msra.mxu0 0
  %517 = vmatprep.subr.bf16.mxu0 0
  %518 = vmatpush1.bf16.msra.mxu0 0
  %519 = vmatprep.subr.bf16.mxu0 0
  %520 = vmatpush1.bf16.msra.mxu0 0
  %521 = vmatprep.subr.bf16.mxu0 0
  %522 = vmatpush1.bf16.msra.mxu0 0
  %523 = vmatprep.subr.bf16.mxu0 0
  %524 = vmatpush1.bf16.msra.mxu0 0
  %525 = vmatprep.subr.bf16.mxu0 0
  %526 = vmatpush1.bf16.msra.mxu0 0
  %527 = vmatprep.subr.bf16.mxu0 0
  %528 = vmatpush1.bf16.msra.mxu0 0
  %529 = vmatprep.subr.bf16.mxu0 0
  %530 = vmatpush1.bf16.msra.mxu0 0
  %531 = vmatprep.subr.bf16.mxu0 0
  %532 = vmatpush1.bf16.msra.mxu0 0
  %533 = vmatprep.subr.bf16.mxu0 0
  %534 = vmatpush1.bf16.msra.mxu0 0
  %535 = vmatprep.subr.bf16.mxu0 0
  %536 = vmatpush1.bf16.msra.mxu0 0
  %537 = vmatprep.subr.bf16.mxu0 0
  %538 = vmatpush1.bf16.msra.mxu0 0
  %539 = vmatprep.mubr.bf16.mxu0 0
  %540 = vmatmul.mubr.bf16.gmra.mrb[0].mxu0 %v505
  %v541 = vpop.f32.mrb[0].mxu0
  %v542 = vadd.f32 0.0, %v541
  %v543 = vpop.f32.mrb[0].mxu0
  %v544 = vpop.f32.mrb[0].mxu0
  %v545 = vpop.f32.mrb[0].mxu0
  %546 = vdwg.mxu0
  %v547 = vadd.f32 %v499, %v542
  %v548 = vxor.u32 %v547, 2147483648
  %v549 = vmul.f32 %v548, 1.442695
  %v550 = vpow.pop %v549
  %v551 = vadd.f32 %v550, 1.0
  %v552 = vrcp.pop %v551
  %v553 = vmul.f32 1.0, %v552
  %v554 = vtanh.pop %v547
  %v555 = vmul.f32 %v553, %v492
  %557 = vrot.lane.b32.xlu0 %v554, 32
  %v558 = vpop.permute.xlu0 %557
  %v560 = vmul.f32 %v553, %v558
  %562 = vrot.lane.b32.xlu0 %v560, 32
  %v563 = vpop.permute.xlu0 %562
  %v565 = vadd.f32 %v555, %v563
  %v566 = vtanh.pop %v565
  %568 = vrot.lane.b32.xlu0 %v566, 32
  %v569 = vpop.permute.xlu0 %568
  %v571 = vmul.f32 %v553, %v569
  %v572 = vld [vmem:[%s111] sm:$0x3]
  %v573 = vpack.c.bf16 %v571, %v571
  %575 = vrot.lane.b32.xlu0 %v573, 64
  %v576 = vpop.permute.xlu0 %575
  %v578 = vsel %vm55, %v576, 0
  %580 = vmatprep.subr.bf16.mxu0 0
  %581 = vmatpush1.bf16.msra.mxu0 %v131
  %582 = vmatprep.subr.bf16.mxu0 0
  %583 = vmatpush1.bf16.msra.mxu0 %v132
  %584 = vmatprep.subr.bf16.mxu0 0
  %585 = vmatpush1.bf16.msra.mxu0 0
  %586 = vmatprep.subr.bf16.mxu0 0
  %587 = vmatpush1.bf16.msra.mxu0 0
  %588 = vmatprep.subr.bf16.mxu0 0
  %589 = vmatpush1.bf16.msra.mxu0 0
  %590 = vmatprep.subr.bf16.mxu0 0
  %591 = vmatpush1.bf16.msra.mxu0 0
  %592 = vmatprep.subr.bf16.mxu0 0
  %593 = vmatpush1.bf16.msra.mxu0 0
  %594 = vmatprep.subr.bf16.mxu0 0
  %595 = vmatpush1.bf16.msra.mxu0 0
  %596 = vmatprep.subr.bf16.mxu0 0
  %597 = vmatpush1.bf16.msra.mxu0 0
  %598 = vmatprep.subr.bf16.mxu0 0
  %599 = vmatpush1.bf16.msra.mxu0 0
  %600 = vmatprep.subr.bf16.mxu0 0
  %601 = vmatpush1.bf16.msra.mxu0 0
  %602 = vmatprep.subr.bf16.mxu0 0
  %603 = vmatpush1.bf16.msra.mxu0 0
  %604 = vmatprep.subr.bf16.mxu0 0
  %605 = vmatpush1.bf16.msra.mxu0 0
  %606 = vmatprep.subr.bf16.mxu0 0
  %607 = vmatpush1.bf16.msra.mxu0 0
  %608 = vmatprep.subr.bf16.mxu0 0
  %609 = vmatpush1.bf16.msra.mxu0 0
  %610 = vmatprep.subr.bf16.mxu0 0
  %611 = vmatpush1.bf16.msra.mxu0 0
  %612 = vmatprep.mubr.bf16.mxu0 0
  %613 = vmatmul.mubr.bf16.gmra.mrb[0].mxu0 %v578
  %v614 = vpop.f32.mrb[0].mxu0
  %v615 = vadd.f32 0.0, %v614
  %v616 = vpop.f32.mrb[0].mxu0
  %v617 = vpop.f32.mrb[0].mxu0
  %v618 = vpop.f32.mrb[0].mxu0
  %619 = vdwg.mxu0
  %v620 = vadd.f32 %v572, %v615
  %v621 = vxor.u32 %v620, 2147483648
  %v622 = vmul.f32 %v621, 1.442695
  %v623 = vpow.pop %v622
  %v624 = vadd.f32 %v623, 1.0
  %v625 = vrcp.pop %v624
  %v626 = vmul.f32 1.0, %v625
  %v627 = vtanh.pop %v620
  %v628 = vmul.f32 %v626, %v565
  %630 = vrot.lane.b32.xlu0 %v627, 32
  %v631 = vpop.permute.xlu0 %630
  %v633 = vmul.f32 %v626, %v631
  %635 = vrot.lane.b32.xlu0 %v633, 32
  %v636 = vpop.permute.xlu0 %635
  %v638 = vadd.f32 %v628, %v636
  %v639 = vtanh.pop %v638
  %641 = vrot.lane.b32.xlu0 %v639, 32
  %v642 = vpop.permute.xlu0 %641
  %v644 = vmul.f32 %v626, %v642
  %v645 = vld [vmem:[%s113] sm:$0x3]
  %v646 = vpack.c.bf16 %v644, %v644
  %648 = vrot.lane.b32.xlu0 %v646, 64
  %v649 = vpop.permute.xlu0 %648
  %v651 = vsel %vm55, %v649, 0
  %653 = vmatprep.subr.bf16.mxu0 0
  %654 = vmatpush1.bf16.msra.mxu0 %v131
  %655 = vmatprep.subr.bf16.mxu0 0
  %656 = vmatpush1.bf16.msra.mxu0 %v132
  %657 = vmatprep.subr.bf16.mxu0 0
  %658 = vmatpush1.bf16.msra.mxu0 0
  %659 = vmatprep.subr.bf16.mxu0 0
  %660 = vmatpush1.bf16.msra.mxu0 0
  %661 = vmatprep.subr.bf16.mxu0 0
  %662 = vmatpush1.bf16.msra.mxu0 0
  %663 = vmatprep.subr.bf16.mxu0 0
  %664 = vmatpush1.bf16.msra.mxu0 0
  %665 = vmatprep.subr.bf16.mxu0 0
  %666 = vmatpush1.bf16.msra.mxu0 0
  %667 = vmatprep.subr.bf16.mxu0 0
  %668 = vmatpush1.bf16.msra.mxu0 0
  %669 = vmatprep.subr.bf16.mxu0 0
  %670 = vmatpush1.bf16.msra.mxu0 0
  %671 = vmatprep.subr.bf16.mxu0 0
  %672 = vmatpush1.bf16.msra.mxu0 0
  %673 = vmatprep.subr.bf16.mxu0 0
  %674 = vmatpush1.bf16.msra.mxu0 0
  %675 = vmatprep.subr.bf16.mxu0 0
  %676 = vmatpush1.bf16.msra.mxu0 0
  %677 = vmatprep.subr.bf16.mxu0 0
  %678 = vmatpush1.bf16.msra.mxu0 0
  %679 = vmatprep.subr.bf16.mxu0 0
  %680 = vmatpush1.bf16.msra.mxu0 0
  %681 = vmatprep.subr.bf16.mxu0 0
  %682 = vmatpush1.bf16.msra.mxu0 0
  %683 = vmatprep.subr.bf16.mxu0 0
  %684 = vmatpush1.bf16.msra.mxu0 0
  %685 = vmatprep.mubr.bf16.mxu0 0
  %686 = vmatmul.mubr.bf16.gmra.mrb[0].mxu0 %v651
  %v687 = vpop.f32.mrb[0].mxu0
  %v688 = vadd.f32 0.0, %v687
  %v689 = vpop.f32.mrb[0].mxu0
  %v690 = vpop.f32.mrb[0].mxu0
  %v691 = vpop.f32.mrb[0].mxu0
  %692 = vdwg.mxu0
  %v693 = vadd.f32 %v645, %v688
  %v694 = vxor.u32 %v693, 2147483648
  %v695 = vmul.f32 %v694, 1.442695
  %v696 = vpow.pop %v695
  %v697 = vadd.f32 %v696, 1.0
  %v698 = vrcp.pop %v697
  %v699 = vmul.f32 1.0, %v698
  %v700 = vtanh.pop %v693
  %v701 = vmul.f32 %v699, %v638
  %703 = vrot.lane.b32.xlu0 %v700, 32
  %v704 = vpop.permute.xlu0 %703
  %v706 = vmul.f32 %v699, %v704
  %708 = vrot.lane.b32.xlu0 %v706, 32
  %v709 = vpop.permute.xlu0 %708
  %v711 = vadd.f32 %v701, %v709
  %v712 = vtanh.pop %v711
  %714 = vrot.lane.b32.xlu0 %v712, 32
  %v715 = vpop.permute.xlu0 %714
  %v717 = vmul.f32 %v699, %v715
  %719 = vrot.lane.b32.xlu0 %v717, 64
  %v720 = vpop.permute.xlu0 %719
  %vm722 = vcmask 254976
  %723 = vst.msk [vmem:[#allocation3] sm:$0x3] %vm722, %v720
  %725 = vrot.lane.b32.xlu0 %v711, 96
  %v726 = vpop.permute.xlu0 %725
  %728 = vst.msk [vmem:[#allocation4] sm:$0x3] %vm722, %v726
  %729 = vst.msk [vmem:[%s4] sm:$0x3] %vm722, %v720
  // Predicated region
  $region22: #{lstm_forward.4} parent=0 // pred_check
    _
  $region23: #{lstm_forward.4} parent=0 // pred_check_branch
    %731 = sbr.rel (0) target = $region25
  $region24: #{lstm_forward.4} parent=0 // pred_region
    _
  $region25: #{lstm_forward.4} parent=0 // pred_fallthru
    _
  // Predicated region
  $region26: #{lstm_forward.4} parent=0 // pred_check
    _
  $region27: #{lstm_forward.4} parent=0 // pred_check_branch
    %733 = sbr.rel (0) target = $region29
  $region28: #{lstm_forward.4} parent=0 // pred_region
    _
  $region29: #{lstm_forward.4} parent=0 // pred_fallthru
    _

// kernel: lstm_forward.3
$region0: #{lstm_forward.3}
  #allocation0 [shape = 'u32[]', space=smem, size = 0x4, offset = 0x4, fixed_abs, tag = 'smem constant byte address 0x4 - core index']
  #allocation1 [shape = 'u32[144,128]{1,0:T(1,128)}', space=vmem, size = 0x12000, scoped, tag = 'internal scratch']
  #allocation2 [shape = 'f32[8,2,128]{2,1,0:T(2,128)}', space=vmem, size = 0x2000, scoped, tag = 'scratch operand']
  #allocation3 [shape = 'f32[1,2,32]{2,1,0:T(2,128)}', space=vmem, size = 0x400, scoped, tag = 'scratch operand']
  #allocation4 [shape = 'f32[1,2,32]{2,1,0:T(2,128)}', space=vmem, size = 0x400, scoped, tag = 'scratch operand']
  %s0 = inlined_call_operand.vmem [shape: bf16[16,16], index: 0, kind: input, shape index: {}]
  %s1 = inlined_call_operand.vmem [shape: bf16[16,128], index: 1, kind: input, shape index: {}]
  %s2 = inlined_call_operand.vmem [shape: f32[1,128], index: 2, kind: input, shape index: {}]
  %s3 = inlined_call_operand.vmem [shape: bf16[32,128], index: 3, kind: input, shape index: {}]
  %s4 = inlined_call_operand.vmem [shape: bf16[8,2,32], index: 4, kind: output, shape index: {}]
  %s5 = sld [smem:[#allocation0]]
  $region30: #{lstm_forward.3} parent=0
    _
  %s7 = ssub.s32 1, %s5
  %s8 = scalar_select 0, %s7, %s5
  // Predicated region
  $region2: #{lstm_forward.3} parent=0 // pred_check
    _
  $region3: #{lstm_forward.3} parent=0 // pred_check_branch
    %10 = sbr.rel (0) target = $region5
  $region4: #{lstm_forward.3} parent=0 // pred_region
    _
  $region5: #{lstm_forward.3} parent=0 // pred_fallthru
    _
  // Predicated region
  $region6: #{lstm_forward.3} parent=0 // pred_check
    _
  $region7: #{lstm_forward.3} parent=0 // pred_check_branch
    %12 = sbr.rel (0) target = $region9
  $region8: #{lstm_forward.3} parent=0 // pred_region
    _
  $region9: #{lstm_forward.3} parent=0 // pred_fallthru
    _
  // Predicated region
  $region10: #{lstm_forward.3} parent=0 // pred_check
    _
  $region11: #{lstm_forward.3} parent=0 // pred_check_branch
    %14 = sbr.rel (0) target = $region13
  $region12: #{lstm_forward.3} parent=0 // pred_region
    _
  $region13: #{lstm_forward.3} parent=0 // pred_fallthru
    _
  // Predicated region
  $region14: #{lstm_forward.3} parent=0 // pred_check
    _
  $region15: #{lstm_forward.3} parent=0 // pred_check_branch
    %16 = sbr.rel (0) target = $region17
  $region16: #{lstm_forward.3} parent=0 // pred_region
    _
  $region17: #{lstm_forward.3} parent=0 // pred_fallthru
    _
  %p18 = scmp.eq.s32.totalorder 0, 0
  // Predicated region
  $region18: #{lstm_forward.3} parent=0 // pred_check
    %p19 = pneg %p18
  $region19: #{lstm_forward.3} parent=0 // pred_check_branch
    %21 = sbr.rel (%p19) target = $region21
  $region20: #{lstm_forward.3} parent=0 // pred_region
    %vm22 = vcmask 254976
    %23 = vst.msk [vmem:[#allocation3] sm:$0x3] %vm22, 0.0
    %24 = vst.msk [vmem:[#allocation4] sm:$0x3] %vm22, 0.0
  $region21: #{lstm_forward.3} parent=0 // pred_fallthru
    _
  %v25 = vld [vmem:[%s0] sm:$0xf]
  %v26 = vld [vmem:[%s0 + $0x4] sm:$0xf]
  %v27 = vld [vmem:[%s1] sm:$0xf]
  %v28 = vld [vmem:[%s1 + $0x4] sm:$0xf]
  %v29 = vld [vmem:[%s2] sm:$0x1]
  %v31 = vlaneseq
  %v32 = vshrl.u32 %v31, 7
  %v33 = vsub.s32 0, %v32
  %v34 = vrot.slane %v29, %v33
  %v38 = vunpack.c.l.b16 %v25
  %v39 = vunpack.c.l.b16 %v26
  %v40 = vpack.c.b16 %v39, %v38
  %v43 = vunpack.c.l.b16 %v27
  %v44 = vunpack.c.l.b16 %v28
  %v45 = vpack.c.b16 %v44, %v43
  %vm47 = vcmask 130048
  %v49 = vsel %vm47, %v40, 0
  %51 = vmatprep.subr.bf16.mxu0 0
  %52 = vmatpush1.bf16.msra.mxu0 %v45
  %53 = vmatprep.subr.bf16.mxu0 0
  %54 = vmatpush1.bf16.msra.mxu0 0
  %55 = vmatprep.subr.bf16.mxu0 0
  %56 = vmatpush1.bf16.msra.mxu0 0
  %57 = vmatprep.subr.bf16.mxu0 0
  %58 = vmatpush1.bf16.msra.mxu0 0
  %59 = vmatprep.subr.bf16.mxu0 0
  %60 = vmatpush1.bf16.msra.mxu0 0
  %61 = vmatprep.subr.bf16.mxu0 0
  %62 = vmatpush1.bf16.msra.mxu0 0
  %63 = vmatprep.subr.bf16.mxu0 0
  %64 = vmatpush1.bf16.msra.mxu0 0
  %65 = vmatprep.subr.bf16.mxu0 0
  %66 = vmatpush1.bf16.msra.mxu0 0
  %67 = vmatprep.subr.bf16.mxu0 0
  %68 = vmatpush1.bf16.msra.mxu0 0
  %69 = vmatprep.subr.bf16.mxu0 0
  %70 = vmatpush1.bf16.msra.mxu0 0
  %71 = vmatprep.subr.bf16.mxu0 0
  %72 = vmatpush1.bf16.msra.mxu0 0
  %73 = vmatprep.subr.bf16.mxu0 0
  %74 = vmatpush1.bf16.msra.mxu0 0
  %75 = vmatprep.subr.bf16.mxu0 0
  %76 = vmatpush1.bf16.msra.mxu0 0
  %77 = vmatprep.subr.bf16.mxu0 0
  %78 = vmatpush1.bf16.msra.mxu0 0
  %79 = vmatprep.subr.bf16.mxu0 0
  %80 = vmatpush1.bf16.msra.mxu0 0
  %81 = vmatprep.subr.bf16.mxu0 0
  %82 = vmatpush1.bf16.msra.mxu0 0
  %83 = vmatprep.mubr.bf16.mxu0 0
  %84 = vmatmul.mubr.bf16.gmra.mrb[0].mxu0 %v49
  %v85 = vpop.f32.mrb[0].mxu0
  %v86 = vadd.f32 %v34, %v85
  %v87 = vpop.f32.mrb[0].mxu0
  %v88 = vpop.f32.mrb[0].mxu0
  %v89 = vadd.f32 %v34, %v88
  %v90 = vpop.f32.mrb[0].mxu0
  %91 = vdwg.mxu0
  %92 = vst [vmem:[#allocation2] sm:$0x3] %v86
  %s93 = scalar_lea.vmem [#allocation2], 2
  %94 = vst [vmem:[%s93 - $0x2] sm:$0xc] %v86
  %s95 = scalar_lea.vmem [#allocation2], 4
  %96 = vst [vmem:[%s95 - $0x4] sm:$0x30] %v86
  %s97 = scalar_lea.vmem [#allocation2], 6
  %98 = vst [vmem:[%s97 - $0x6] sm:$0xc0] %v86
  %s99 = scalar_lea.vmem [#allocation2], 8
  %100 = vst [vmem:[%s99] sm:$0x3] %v89
  %s101 = scalar_lea.vmem [#allocation2], 10
  %102 = vst [vmem:[%s101 - $0x2] sm:$0xc] %v89
  %s103 = scalar_lea.vmem [#allocation2], 12
  %104 = vst [vmem:[%s103 - $0x4] sm:$0x30] %v89
  %s105 = scalar_lea.vmem [#allocation2], 14
  %106 = vst [vmem:[%s105 - $0x6] sm:$0xc0] %v89
  %v107 = vld [vmem:[%s3] sm:$0xf]
  %v108 = vld [vmem:[%s3 + $0x4] sm:$0xf]
  %v109 = vld [vmem:[%s3 + $0x8] sm:$0xf]
  %v110 = vld [vmem:[%s3 + $0xc] sm:$0xf]
  %v111 = vld [vmem:[#allocation3] sm:$0x3]
  %v112 = vld [vmem:[#allocation4] sm:$0x3]
  %v113 = vld [vmem:[#allocation2] sm:$0x3]
  %v114 = vpack.c.bf16 %v111, %v111
  %v119 = vunpack.c.l.b16 %v107
  %v120 = vunpack.c.l.b16 %v108
  %v121 = vunpack.c.l.b16 %v109
  %v122 = vunpack.c.l.b16 %v110
  %v123 = vpack.c.b16 %v120, %v119
  %v124 = vpack.c.b16 %v122, %v121
  %vm127 = vcmask 261120
  %v129 = vsel %vm127, %v114, 0
  %131 = vmatprep.subr.bf16.mxu0 0
  %132 = vmatpush1.bf16.msra.mxu0 %v123
  %133 = vmatprep.subr.bf16.mxu0 0
  %134 = vmatpush1.bf16.msra.mxu0 %v124
  %135 = vmatprep.subr.bf16.mxu0 0
  %136 = vmatpush1.bf16.msra.mxu0 0
  %137 = vmatprep.subr.bf16.mxu0 0
  %138 = vmatpush1.bf16.msra.mxu0 0
  %139 = vmatprep.subr.bf16.mxu0 0
  %140 = vmatpush1.bf16.msra.mxu0 0
  %141 = vmatprep.subr.bf16.mxu0 0
  %142 = vmatpush1.bf16.msra.mxu0 0
  %143 = vmatprep.subr.bf16.mxu0 0
  %144 = vmatpush1.bf16.msra.mxu0 0
  %145 = vmatprep.subr.bf16.mxu0 0
  %146 = vmatpush1.bf16.msra.mxu0 0
  %147 = vmatprep.subr.bf16.mxu0 0
  %148 = vmatpush1.bf16.msra.mxu0 0
  %149 = vmatprep.subr.bf16.mxu0 0
  %150 = vmatpush1.bf16.msra.mxu0 0
  %151 = vmatprep.subr.bf16.mxu0 0
  %152 = vmatpush1.bf16.msra.mxu0 0
  %153 = vmatprep.subr.bf16.mxu0 0
  %154 = vmatpush1.bf16.msra.mxu0 0
  %155 = vmatprep.subr.bf16.mxu0 0
  %156 = vmatpush1.bf16.msra.mxu0 0
  %157 = vmatprep.subr.bf16.mxu0 0
  %158 = vmatpush1.bf16.msra.mxu0 0
  %159 = vmatprep.subr.bf16.mxu0 0
  %160 = vmatpush1.bf16.msra.mxu0 0
  %161 = vmatprep.subr.bf16.mxu0 0
  %162 = vmatpush1.bf16.msra.mxu0 0
  %163 = vmatprep.mubr.bf16.mxu0 0
  %164 = vmatmul.mubr.bf16.gmra.mrb[0].mxu0 %v129
  %v165 = vpop.f32.mrb[0].mxu0
  %v166 = vadd.f32 0.0, %v165
  %v167 = vpop.f32.mrb[0].mxu0
  %v168 = vpop.f32.mrb[0].mxu0
  %v169 = vpop.f32.mrb[0].mxu0
  %170 = vdwg.mxu0
  %v171 = vadd.f32 %v113, %v166
  %v172 = vxor.u32 %v171, 2147483648
  %v173 = vmul.f32 %v172, 1.442695
  %v174 = vpow.pop %v173
  %v175 = vadd.f32 %v174, 1.0
  %v176 = vrcp.pop %v175
  %v177 = vmul.f32 1.0, %v176
  %v178 = vtanh.pop %v171
  %180 = vrot.lane.b32.xlu0 %v112, 32
  %v181 = vpop.permute.xlu0 %180
  %v183 = vmul.f32 %v177, %v181
  %185 = vrot.lane.b32.xlu0 %v178, 32
  %v186 = vpop.permute.xlu0 %185
  %v188 = vmul.f32 %v177, %v186
  %190 = vrot.lane.b32.xlu0 %v188, 32
  %v191 = vpop.permute.xlu0 %190
  %v193 = vadd.f32 %v183, %v191
  %v194 = vtanh.pop %v193
  %196 = vrot.lane.b32.xlu0 %v194, 32
  %v197 = vpop.permute.xlu0 %196
  %v199 = vmul.f32 %v177, %v197
  %v200 = vpack.c.bf16 %v199, %v199
  %v203 = vunpack.c.l.s4 1966171168
  %v204 = vunpack.c.0.s8 %v203
  %v205 = vlaneseq
  %v206 = vshrl.u32 %v205, 7
  %v207 = vsub.s32 %v204, %v206
  %v208 = vrot.slane %v200, %v207
  %v210 = vunpack.c.l.s4 1966171168
  %v211 = vunpack.c.0.s8 %v210
  %v212 = vlaneseq
  %v213 = vshrl.u32 %v212, 7
  %v214 = vsub.s32 %v211, %v213
  %v215 = vrot.slane %v208, %v214
  %216 = vrot.lane.b32.xlu0 %v215, 64
  %v217 = vpop.permute.xlu0 %216
  %vm219 = vcmask 253952
  %220 = vst.msk [vmem:[%s4] sm:$0x1] %vm219, %v217
  %v221 = vld [vmem:[%s93] sm:$0x3]
  %222 = vrot.lane.b32.xlu0 %v200, 64
  %v223 = vpop.permute.xlu0 %222
  %v225 = vsel %vm127, %v223, 0
  %227 = vmatprep.subr.bf16.mxu0 0
  %228 = vmatpush1.bf16.msra.mxu0 %v123
  %229 = vmatprep.subr.bf16.mxu0 0
  %230 = vmatpush1.bf16.msra.mxu0 %v124
  %231 = vmatprep.subr.bf16.mxu0 0
  %232 = vmatpush1.bf16.msra.mxu0 0
  %233 = vmatprep.subr.bf16.mxu0 0
  %234 = vmatpush1.bf16.msra.mxu0 0
  %235 = vmatprep.subr.bf16.mxu0 0
  %236 = vmatpush1.bf16.msra.mxu0 0
  %237 = vmatprep.subr.bf16.mxu0 0
  %238 = vmatpush1.bf16.msra.mxu0 0
  %239 = vmatprep.subr.bf16.mxu0 0
  %240 = vmatpush1.bf16.msra.mxu0 0
  %241 = vmatprep.subr.bf16.mxu0 0
  %242 = vmatpush1.bf16.msra.mxu0 0
  %243 = vmatprep.subr.bf16.mxu0 0
  %244 = vmatpush1.bf16.msra.mxu0 0
  %245 = vmatprep.subr.bf16.mxu0 0
  %246 = vmatpush1.bf16.msra.mxu0 0
  %247 = vmatprep.subr.bf16.mxu0 0
  %248 = vmatpush1.bf16.msra.mxu0 0
  %249 = vmatprep.subr.bf16.mxu0 0
  %250 = vmatpush1.bf16.msra.mxu0 0
  %251 = vmatprep.subr.bf16.mxu0 0
  %252 = vmatpush1.bf16.msra.mxu0 0
  %253 = vmatprep.subr.bf16.mxu0 0
  %254 = vmatpush1.bf16.msra.mxu0 0
  %255 = vmatprep.subr.bf16.mxu0 0
  %256 = vmatpush1.bf16.msra.mxu0 0
  %257 = vmatprep.subr.bf16.mxu0 0
  %258 = vmatpush1.bf16.msra.mxu0 0
  %259 = vmatprep.mubr.bf16.mxu0 0
  %260 = vmatmul.mubr.bf16.gmra.mrb[0].mxu0 %v225
  %v261 = vpop.f32.mrb[0].mxu0
  %v262 = vadd.f32 0.0, %v261
  %v263 = vpop.f32.mrb[0].mxu0
  %v264 = vpop.f32.mrb[0].mxu0
  %v265 = vpop.f32.mrb[0].mxu0
  %266 = vdwg.mxu0
  %v267 = vadd.f32 %v221, %v262
  %v268 = vxor.u32 %v267, 2147483648
  %v269 = vmul.f32 %v268, 1.442695
  %v270 = vpow.pop %v269
  %v271 = vadd.f32 %v270, 1.0
  %v272 = vrcp.pop %v271
  %v273 = vmul.f32 1.0, %v272
  %v274 = vtanh.pop %v267
  %v275 = vmul.f32 %v273, %v193
  %277 = vrot.lane.b32.xlu0 %v274, 32
  %v278 = vpop.permute.xlu0 %277
  %v280 = vmul.f32 %v273, %v278
  %282 = vrot.lane.b32.xlu0 %v280, 32
  %v283 = vpop.permute.xlu0 %282
  %v285 = vadd.f32 %v275, %v283
  %v286 = vtanh.pop %v285
  %288 = vrot.lane.b32.xlu0 %v286, 32
  %v289 = vpop.permute.xlu0 %288
  %v291 = vmul.f32 %v273, %v289
  %v292 = vpack.c.bf16 %v291, %v291
  %v295 = vunpack.c.l.s4 1966171168
  %v296 = vunpack.c.0.s8 %v295
  %v297 = vlaneseq
  %v298 = vshrl.u32 %v297, 7
  %v299 = vsub.s32 %v296, %v298
  %v300 = vrot.slane %v292, %v299
  %v302 = vunpack.c.l.s4 1966171168
  %v303 = vunpack.c.0.s8 %v302
  %v304 = vlaneseq
  %v305 = vshrl.u32 %v304, 7
  %v306 = vsub.s32 %v303, %v305
  %v307 = vrot.slane %v300, %v306
  %308 = vrot.lane.b32.xlu0 %v307, 64
  %v309 = vpop.permute.xlu0 %308
  %s311 = scalar_lea.vmem %s4, 1
  %312 = vst.msk [vmem:[%s311] sm:$0x1] %vm219, %v309
  %v313 = vld [vmem:[%s95] sm:$0x3]
  %314 = vrot.lane.b32.xlu0 %v292, 64
  %v315 = vpop.permute.xlu0 %314
  %v317 = vsel %vm127, %v315, 0
  %319 = vmatprep.subr.bf16.mxu0 0
  %320 = vmatpush1.bf16.msra.mxu0 %v123
  %321 = vmatprep.subr.bf16.mxu0 0
  %322 = vmatpush1.bf16.msra.mxu0 %v124
  %323 = vmatprep.subr.bf16.mxu0 0
  %324 = vmatpush1.bf16.msra.mxu0 0
  %325 = vmatprep.subr.bf16.mxu0 0
  %326 = vmatpush1.bf16.msra.mxu0 0
  %327 = vmatprep.subr.bf16.mxu0 0
  %328 = vmatpush1.bf16.msra.mxu0 0
  %329 = vmatprep.subr.bf16.mxu0 0
  %330 = vmatpush1.bf16.msra.mxu0 0
  %331 = vmatprep.subr.bf16.mxu0 0
  %332 = vmatpush1.bf16.msra.mxu0 0
  %333 = vmatprep.subr.bf16.mxu0 0
  %334 = vmatpush1.bf16.msra.mxu0 0
  %335 = vmatprep.subr.bf16.mxu0 0
  %336 = vmatpush1.bf16.msra.mxu0 0
  %337 = vmatprep.subr.bf16.mxu0 0
  %338 = vmatpush1.bf16.msra.mxu0 0
  %339 = vmatprep.subr.bf16.mxu0 0
  %340 = vmatpush1.bf16.msra.mxu0 0
  %341 = vmatprep.subr.bf16.mxu0 0
  %342 = vmatpush1.bf16.msra.mxu0 0
  %343 = vmatprep.subr.bf16.mxu0 0
  %344 = vmatpush1.bf16.msra.mxu0 0
  %345 = vmatprep.subr.bf16.mxu0 0
  %346 = vmatpush1.bf16.msra.mxu0 0
  %347 = vmatprep.subr.bf16.mxu0 0
  %348 = vmatpush1.bf16.msra.mxu0 0
  %349 = vmatprep.subr.bf16.mxu0 0
  %350 = vmatpush1.bf16.msra.mxu0 0
  %351 = vmatprep.mubr.bf16.mxu0 0
  %352 = vmatmul.mubr.bf16.gmra.mrb[0].mxu0 %v317
  %v353 = vpop.f32.mrb[0].mxu0
  %v354 = vadd.f32 0.0, %v353
  %v355 = vpop.f32.mrb[0].mxu0
  %v356 = vpop.f32.mrb[0].mxu0
  %v357 = vpop.f32.mrb[0].mxu0
  %358 = vdwg.mxu0
  %v359 = vadd.f32 %v313, %v354
  %v360 = vxor.u32 %v359, 2147483648
  %v361 = vmul.f32 %v360, 1.442695
  %v362 = vpow.pop %v361
  %v363 = vadd.f32 %v362, 1.0
  %v364 = vrcp.pop %v363
  %v365 = vmul.f32 1.0, %v364
  %v366 = vtanh.pop %v359
  %v367 = vmul.f32 %v365, %v285
  %369 = vrot.lane.b32.xlu0 %v366, 32
  %v370 = vpop.permute.xlu0 %369
  %v372 = vmul.f32 %v365, %v370
  %374 = vrot.lane.b32.xlu0 %v372, 32
  %v375 = vpop.permute.xlu0 %374
  %v377 = vadd.f32 %v367, %v375
  %v378 = vtanh.pop %v377
  %380 = vrot.lane.b32.xlu0 %v378, 32
  %v381 = vpop.permute.xlu0 %380
  %v383 = vmul.f32 %v365, %v381
  %v384 = vpack.c.bf16 %v383, %v383
  %v387 = vunpack.c.l.s4 1966171168
  %v388 = vunpack.c.0.s8 %v387
  %v389 = vlaneseq
  %v390 = vshrl.u32 %v389, 7
  %v391 = vsub.s32 %v388, %v390
  %v392 = vrot.slane %v384, %v391
  %v394 = vunpack.c.l.s4 1966171168
  %v395 = vunpack.c.0.s8 %v394
  %v396 = vlaneseq
  %v397 = vshrl.u32 %v396, 7
  %v398 = vsub.s32 %v395, %v397
  %v399 = vrot.slane %v392, %v398
  %400 = vrot.lane.b32.xlu0 %v399, 64
  %v401 = vpop.permute.xlu0 %400
  %s403 = scalar_lea.vmem %s4, 2
  %404 = vst.msk [vmem:[%s403] sm:$0x1] %vm219, %v401
  %v405 = vld [vmem:[%s97] sm:$0x3]
  %406 = vrot.lane.b32.xlu0 %v384, 64
  %v407 = vpop.permute.xlu0 %406
  %v409 = vsel %vm127, %v407, 0
  %411 = vmatprep.subr.bf16.mxu0 0
  %412 = vmatpush1.bf16.msra.mxu0 %v123
  %413 = vmatprep.subr.bf16.mxu0 0
  %414 = vmatpush1.bf16.msra.mxu0 %v124
  %415 = vmatprep.subr.bf16.mxu0 0
  %416 = vmatpush1.bf16.msra.mxu0 0
  %417 = vmatprep.subr.bf16.mxu0 0
  %418 = vmatpush1.bf16.msra.mxu0 0
  %419 = vmatprep.subr.bf16.mxu0 0
  %420 = vmatpush1.bf16.msra.mxu0 0
  %421 = vmatprep.subr.bf16.mxu0 0
  %422 = vmatpush1.bf16.msra.mxu0 0
  %423 = vmatprep.subr.bf16.mxu0 0
  %424 = vmatpush1.bf16.msra.mxu0 0
  %425 = vmatprep.subr.bf16.mxu0 0
  %426 = vmatpush1.bf16.msra.mxu0 0
  %427 = vmatprep.subr.bf16.mxu0 0
  %428 = vmatpush1.bf16.msra.mxu0 0
  %429 = vmatprep.subr.bf16.mxu0 0
  %430 = vmatpush1.bf16.msra.mxu0 0
  %431 = vmatprep.subr.bf16.mxu0 0
  %432 = vmatpush1.bf16.msra.mxu0 0
  %433 = vmatprep.subr.bf16.mxu0 0
  %434 = vmatpush1.bf16.msra.mxu0 0
  %435 = vmatprep.subr.bf16.mxu0 0
  %436 = vmatpush1.bf16.msra.mxu0 0
  %437 = vmatprep.subr.bf16.mxu0 0
  %438 = vmatpush1.bf16.msra.mxu0 0
  %439 = vmatprep.subr.bf16.mxu0 0
  %440 = vmatpush1.bf16.msra.mxu0 0
  %441 = vmatprep.subr.bf16.mxu0 0
  %442 = vmatpush1.bf16.msra.mxu0 0
  %443 = vmatprep.mubr.bf16.mxu0 0
  %444 = vmatmul.mubr.bf16.gmra.mrb[0].mxu0 %v409
  %v445 = vpop.f32.mrb[0].mxu0
  %v446 = vadd.f32 0.0, %v445
  %v447 = vpop.f32.mrb[0].mxu0
  %v448 = vpop.f32.mrb[0].mxu0
  %v449 = vpop.f32.mrb[0].mxu0
  %450 = vdwg.mxu0
  %v451 = vadd.f32 %v405, %v446
  %v452 = vxor.u32 %v451, 2147483648
  %v453 = vmul.f32 %v452, 1.442695
  %v454 = vpow.pop %v453
  %v455 = vadd.f32 %v454, 1.0
  %v456 = vrcp.pop %v455
  %v457 = vmul.f32 1.0, %v456
  %v458 = vtanh.pop %v451
  %v459 = vmul.f32 %v457, %v377
  %461 = vrot.lane.b32.xlu0 %v458, 32
  %v462 = vpop.permute.xlu0 %461
  %v464 = vmul.f32 %v457, %v462
  %466 = vrot.lane.b32.xlu0 %v464, 32
  %v467 = vpop.permute.xlu0 %466
  %v469 = vadd.f32 %v459, %v467
  %v470 = vtanh.pop %v469
  %472 = vrot.lane.b32.xlu0 %v470, 32
  %v473 = vpop.permute.xlu0 %472
  %v475 = vmul.f32 %v457, %v473
  %v476 = vpack.c.bf16 %v475, %v475
  %v479 = vunpack.c.l.s4 1966171168
  %v480 = vunpack.c.0.s8 %v479
  %v481 = vlaneseq
  %v482 = vshrl.u32 %v481, 7
  %v483 = vsub.s32 %v480, %v482
  %v484 = vrot.slane %v476, %v483
  %v486 = vunpack.c.l.s4 1966171168
  %v487 = vunpack.c.0.s8 %v486
  %v488 = vlaneseq
  %v489 = vshrl.u32 %v488, 7
  %v490 = vsub.s32 %v487, %v489
  %v491 = vrot.slane %v484, %v490
  %492 = vrot.lane.b32.xlu0 %v491, 64
  %v493 = vpop.permute.xlu0 %492
  %s495 = scalar_lea.vmem %s4, 3
  %496 = vst.msk [vmem:[%s495] sm:$0x1] %vm219, %v493
  %v497 = vld [vmem:[%s99] sm:$0x3]
  %498 = vrot.lane.b32.xlu0 %v476, 64
  %v499 = vpop.permute.xlu0 %498
  %v501 = vsel %vm127, %v499, 0
  %503 = vmatprep.subr.bf16.mxu0 0
  %504 = vmatpush1.bf16.msra.mxu0 %v123
  %505 = vmatprep.subr.bf16.mxu0 0
  %506 = vmatpush1.bf16.msra.mxu0 %v124
  %507 = vmatprep.subr.bf16.mxu0 0
  %508 = vmatpush1.bf16.msra.mxu0 0
  %509 = vmatprep.subr.bf16.mxu0 0
  %510 = vmatpush1.bf16.msra.mxu0 0
  %511 = vmatprep.subr.bf16.mxu0 0
  %512 = vmatpush1.bf16.msra.mxu0 0
  %513 = vmatprep.subr.bf16.mxu0 0
  %514 = vmatpush1.bf16.msra.mxu0 0
  %515 = vmatprep.subr.bf16.mxu0 0
  %516 = vmatpush1.bf16.msra.mxu0 0
  %517 = vmatprep.subr.bf16.mxu0 0
  %518 = vmatpush1.bf16.msra.mxu0 0
  %519 = vmatprep.subr.bf16.mxu0 0
  %520 = vmatpush1.bf16.msra.mxu0 0
  %521 = vmatprep.subr.bf16.mxu0 0
  %522 = vmatpush1.bf16.msra.mxu0 0
  %523 = vmatprep.subr.bf16.mxu0 0
  %524 = vmatpush1.bf16.msra.mxu0 0
  %525 = vmatprep.subr.bf16.mxu0 0
  %526 = vmatpush1.bf16.msra.mxu0 0
  %527 = vmatprep.subr.bf16.mxu0 0
  %528 = vmatpush1.bf16.msra.mxu0 0
  %529 = vmatprep.subr.bf16.mxu0 0
  %530 = vmatpush1.bf16.msra.mxu0 0
  %531 = vmatprep.subr.bf16.mxu0 0
  %532 = vmatpush1.bf16.msra.mxu0 0
  %533 = vmatprep.subr.bf16.mxu0 0
  %534 = vmatpush1.bf16.msra.mxu0 0
  %535 = vmatprep.mubr.bf16.mxu0 0
  %536 = vmatmul.mubr.bf16.gmra.mrb[0].mxu0 %v501
  %v537 = vpop.f32.mrb[0].mxu0
  %v538 = vadd.f32 0.0, %v537
  %v539 = vpop.f32.mrb[0].mxu0
  %v540 = vpop.f32.mrb[0].mxu0
  %v541 = vpop.f32.mrb[0].mxu0
  %542 = vdwg.mxu0
  %v543 = vadd.f32 %v497, %v538
  %v544 = vxor.u32 %v543, 2147483648
  %v545 = vmul.f32 %v544, 1.442695
  %v546 = vpow.pop %v545
  %v547 = vadd.f32 %v546, 1.0
  %v548 = vrcp.pop %v547
  %v549 = vmul.f32 1.0, %v548
  %v550 = vtanh.pop %v543
  %v551 = vmul.f32 %v549, %v469
  %553 = vrot.lane.b32.xlu0 %v550, 32
  %v554 = vpop.permute.xlu0 %553
  %v556 = vmul.f32 %v549, %v554
  %558 = vrot.lane.b32.xlu0 %v556, 32
  %v559 = vpop.permute.xlu0 %558
  %v561 = vadd.f32 %v551, %v559
  %v562 = vtanh.pop %v561
  %564 = vrot.lane.b32.xlu0 %v562, 32
  %v565 = vpop.permute.xlu0 %564
  %v567 = vmul.f32 %v549, %v565
  %v568 = vpack.c.bf16 %v567, %v567
  %v571 = vunpack.c.l.s4 1966171168
  %v572 = vunpack.c.0.s8 %v571
  %v573 = vlaneseq
  %v574 = vshrl.u32 %v573, 7
  %v575 = vsub.s32 %v572, %v574
  %v576 = vrot.slane %v568, %v575
  %v578 = vunpack.c.l.s4 1966171168
  %v579 = vunpack.c.0.s8 %v578
  %v580 = vlaneseq
  %v581 = vshrl.u32 %v580, 7
  %v582 = vsub.s32 %v579, %v581
  %v583 = vrot.slane %v576, %v582
  %584 = vrot.lane.b32.xlu0 %v583, 64
  %v585 = vpop.permute.xlu0 %584
  %s587 = scalar_lea.vmem %s4, 4
  %588 = vst.msk [vmem:[%s587] sm:$0x1] %vm219, %v585
  %v589 = vld [vmem:[%s101] sm:$0x3]
  %590 = vrot.lane.b32.xlu0 %v568, 64
  %v591 = vpop.permute.xlu0 %590
  %v593 = vsel %vm127, %v591, 0
  %595 = vmatprep.subr.bf16.mxu0 0
  %596 = vmatpush1.bf16.msra.mxu0 %v123
  %597 = vmatprep.subr.bf16.mxu0 0
  %598 = vmatpush1.bf16.msra.mxu0 %v124
  %599 = vmatprep.subr.bf16.mxu0 0
  %600 = vmatpush1.bf16.msra.mxu0 0
  %601 = vmatprep.subr.bf16.mxu0 0
  %602 = vmatpush1.bf16.msra.mxu0 0
  %603 = vmatprep.subr.bf16.mxu0 0
  %604 = vmatpush1.bf16.msra.mxu0 0
  %605 = vmatprep.subr.bf16.mxu0 0
  %606 = vmatpush1.bf16.msra.mxu0 0
  %607 = vmatprep.subr.bf16.mxu0 0
  %608 = vmatpush1.bf16.msra.mxu0 0
  %609 = vmatprep.subr.bf16.mxu0 0
  %610 = vmatpush1.bf16.msra.mxu0 0
  %611 = vmatprep.subr.bf16.mxu0 0
  %612 = vmatpush1.bf16.msra.mxu0 0
  %613 = vmatprep.subr.bf16.mxu0 0
  %614 = vmatpush1.bf16.msra.mxu0 0
  %615 = vmatprep.subr.bf16.mxu0 0
  %616 = vmatpush1.bf16.msra.mxu0 0
  %617 = vmatprep.subr.bf16.mxu0 0
  %618 = vmatpush1.bf16.msra.mxu0 0
  %619 = vmatprep.subr.bf16.mxu0 0
  %620 = vmatpush1.bf16.msra.mxu0 0
  %621 = vmatprep.subr.bf16.mxu0 0
  %622 = vmatpush1.bf16.msra.mxu0 0
  %623 = vmatprep.subr.bf16.mxu0 0
  %624 = vmatpush1.bf16.msra.mxu0 0
  %625 = vmatprep.subr.bf16.mxu0 0
  %626 = vmatpush1.bf16.msra.mxu0 0
  %627 = vmatprep.mubr.bf16.mxu0 0
  %628 = vmatmul.mubr.bf16.gmra.mrb[0].mxu0 %v593
  %v629 = vpop.f32.mrb[0].mxu0
  %v630 = vadd.f32 0.0, %v629
  %v631 = vpop.f32.mrb[0].mxu0
  %v632 = vpop.f32.mrb[0].mxu0
  %v633 = vpop.f32.mrb[0].mxu0
  %634 = vdwg.mxu0
  %v635 = vadd.f32 %v589, %v630
  %v636 = vxor.u32 %v635, 2147483648
  %v637 = vmul.f32 %v636, 1.442695
  %v638 = vpow.pop %v637
  %v639 = vadd.f32 %v638, 1.0
  %v640 = vrcp.pop %v639
  %v641 = vmul.f32 1.0, %v640
  %v642 = vtanh.pop %v635
  %v643 = vmul.f32 %v641, %v561
  %645 = vrot.lane.b32.xlu0 %v642, 32
  %v646 = vpop.permute.xlu0 %645
  %v648 = vmul.f32 %v641, %v646
  %650 = vrot.lane.b32.xlu0 %v648, 32
  %v651 = vpop.permute.xlu0 %650
  %v653 = vadd.f32 %v643, %v651
  %v654 = vtanh.pop %v653
  %656 = vrot.lane.b32.xlu0 %v654, 32
  %v657 = vpop.permute.xlu0 %656
  %v659 = vmul.f32 %v641, %v657
  %v660 = vpack.c.bf16 %v659, %v659
  %v663 = vunpack.c.l.s4 1966171168
  %v664 = vunpack.c.0.s8 %v663
  %v665 = vlaneseq
  %v666 = vshrl.u32 %v665, 7
  %v667 = vsub.s32 %v664, %v666
  %v668 = vrot.slane %v660, %v667
  %v670 = vunpack.c.l.s4 1966171168
  %v671 = vunpack.c.0.s8 %v670
  %v672 = vlaneseq
  %v673 = vshrl.u32 %v672, 7
  %v674 = vsub.s32 %v671, %v673
  %v675 = vrot.slane %v668, %v674
  %676 = vrot.lane.b32.xlu0 %v675, 64
  %v677 = vpop.permute.xlu0 %676
  %s679 = scalar_lea.vmem %s4, 5
  %680 = vst.msk [vmem:[%s679] sm:$0x1] %vm219, %v677
  %v681 = vld [vmem:[%s103] sm:$0x3]
  %682 = vrot.lane.b32.xlu0 %v660, 64
  %v683 = vpop.permute.xlu0 %682
  %v685 = vsel %vm127, %v683, 0
  %687 = vmatprep.subr.bf16.mxu0 0
  %688 = vmatpush1.bf16.msra.mxu0 %v123
  %689 = vmatprep.subr.bf16.mxu0 0
  %690 = vmatpush1.bf16.msra.mxu0 %v124
  %691 = vmatprep.subr.bf16.mxu0 0
  %692 = vmatpush1.bf16.msra.mxu0 0
  %693 = vmatprep.subr.bf16.mxu0 0
  %694 = vmatpush1.bf16.msra.mxu0 0
  %695 = vmatprep.subr.bf16.mxu0 0
  %696 = vmatpush1.bf16.msra.mxu0 0
  %697 = vmatprep.subr.bf16.mxu0 0
  %698 = vmatpush1.bf16.msra.mxu0 0
  %699 = vmatprep.subr.bf16.mxu0 0
  %700 = vmatpush1.bf16.msra.mxu0 0
  %701 = vmatprep.subr.bf16.mxu0 0
  %702 = vmatpush1.bf16.msra.mxu0 0
  %703 = vmatprep.subr.bf16.mxu0 0
  %704 = vmatpush1.bf16.msra.mxu0 0
  %705 = vmatprep.subr.bf16.mxu0 0
  %706 = vmatpush1.bf16.msra.mxu0 0
  %707 = vmatprep.subr.bf16.mxu0 0
  %708 = vmatpush1.bf16.msra.mxu0 0
  %709 = vmatprep.subr.bf16.mxu0 0
  %710 = vmatpush1.bf16.msra.mxu0 0
  %711 = vmatprep.subr.bf16.mxu0 0
  %712 = vmatpush1.bf16.msra.mxu0 0
  %713 = vmatprep.subr.bf16.mxu0 0
  %714 = vmatpush1.bf16.msra.mxu0 0
  %715 = vmatprep.subr.bf16.mxu0 0
  %716 = vmatpush1.bf16.msra.mxu0 0
  %717 = vmatprep.subr.bf16.mxu0 0
  %718 = vmatpush1.bf16.msra.mxu0 0
  %719 = vmatprep.mubr.bf16.mxu0 0
  %720 = vmatmul.mubr.bf16.gmra.mrb[0].mxu0 %v685
  %v721 = vpop.f32.mrb[0].mxu0
  %v722 = vadd.f32 0.0, %v721
  %v723 = vpop.f32.mrb[0].mxu0
  %v724 = vpop.f32.mrb[0].mxu0
  %v725 = vpop.f32.mrb[0].mxu0
  %726 = vdwg.mxu0
  %v727 = vadd.f32 %v681, %v722
  %v728 = vxor.u32 %v727, 2147483648
  %v729 = vmul.f32 %v728, 1.442695
  %v730 = vpow.pop %v729
  %v731 = vadd.f32 %v730, 1.0
  %v732 = vrcp.pop %v731
  %v733 = vmul.f32 1.0, %v732
  %v734 = vtanh.pop %v727
  %v735 = vmul.f32 %v733, %v653
  %737 = vrot.lane.b32.xlu0 %v734, 32
  %v738 = vpop.permute.xlu0 %737
  %v740 = vmul.f32 %v733, %v738
  %742 = vrot.lane.b32.xlu0 %v740, 32
  %v743 = vpop.permute.xlu0 %742
  %v745 = vadd.f32 %v735, %v743
  %v746 = vtanh.pop %v745
  %748 = vrot.lane.b32.xlu0 %v746, 32
  %v749 = vpop.permute.xlu0 %748
  %v751 = vmul.f32 %v733, %v749
  %v752 = vpack.c.bf16 %v751, %v751
  %v755 = vunpack.c.l.s4 1966171168
  %v756 = vunpack.c.0.s8 %v755
  %v757 = vlaneseq
  %v758 = vshrl.u32 %v757, 7
  %v759 = vsub.s32 %v756, %v758
  %v760 = vrot.slane %v752, %v759
  %v762 = vunpack.c.l.s4 1966171168
  %v763 = vunpack.c.0.s8 %v762
  %v764 = vlaneseq
  %v765 = vshrl.u32 %v764, 7
  %v766 = vsub.s32 %v763, %v765
  %v767 = vrot.slane %v760, %v766
  %768 = vrot.lane.b32.xlu0 %v767, 64
  %v769 = vpop.permute.xlu0 %768
  %s771 = scalar_lea.vmem %s4, 6
  %772 = vst.msk [vmem:[%s771] sm:$0x1] %vm219, %v769
  %v773 = vld [vmem:[%s105] sm:$0x3]
  %774 = vrot.lane.b32.xlu0 %v752, 64
  %v775 = vpop.permute.xlu0 %774
  %v777 = vsel %vm127, %v775, 0
  %779 = vmatprep.subr.bf16.mxu0 0
  %780 = vmatpush1.bf16.msra.mxu0 %v123
  %781 = vmatprep.subr.bf16.mxu0 0
  %782 = vmatpush1.bf16.msra.mxu0 %v124
  %783 = vmatprep.subr.bf16.mxu0 0
  %784 = vmatpush1.bf16.msra.mxu0 0
  %785 = vmatprep.subr.bf16.mxu0 0
  %786 = vmatpush1.bf16.msra.mxu0 0
  %787 = vmatprep.subr.bf16.mxu0 0
  %788 = vmatpush1.bf16.msra.mxu0 0
  %789 = vmatprep.subr.bf16.mxu0 0
  %790 = vmatpush1.bf16.msra.mxu0 0
  %791 = vmatprep.subr.bf16.mxu0 0
  %792 = vmatpush1.bf16.msra.mxu0 0
  %793 = vmatprep.subr.bf16.mxu0 0
  %794 = vmatpush1.bf16.msra.mxu0 0
  %795 = vmatprep.subr.bf16.mxu0 0
  %796 = vmatpush1.bf16.msra.mxu0 0
  %797 = vmatprep.subr.bf16.mxu0 0
  %798 = vmatpush1.bf16.msra.mxu0 0
  %799 = vmatprep.subr.bf16.mxu0 0
  %800 = vmatpush1.bf16.msra.mxu0 0
  %801 = vmatprep.subr.bf16.mxu0 0
  %802 = vmatpush1.bf16.msra.mxu0 0
  %803 = vmatprep.subr.bf16.mxu0 0
  %804 = vmatpush1.bf16.msra.mxu0 0
  %805 = vmatprep.subr.bf16.mxu0 0
  %806 = vmatpush1.bf16.msra.mxu0 0
  %807 = vmatprep.subr.bf16.mxu0 0
  %808 = vmatpush1.bf16.msra.mxu0 0
  %809 = vmatprep.subr.bf16.mxu0 0
  %810 = vmatpush1.bf16.msra.mxu0 0
  %811 = vmatprep.mubr.bf16.mxu0 0
  %812 = vmatmul.mubr.bf16.gmra.mrb[0].mxu0 %v777
  %v813 = vpop.f32.mrb[0].mxu0
  %v814 = vadd.f32 0.0, %v813
  %v815 = vpop.f32.mrb[0].mxu0
  %v816 = vpop.f32.mrb[0].mxu0
  %v817 = vpop.f32.mrb[0].mxu0
  %818 = vdwg.mxu0
  %v819 = vadd.f32 %v773, %v814
  %v820 = vxor.u32 %v819, 2147483648
  %v821 = vmul.f32 %v820, 1.442695
  %v822 = vpow.pop %v821
  %v823 = vadd.f32 %v822, 1.0
  %v824 = vrcp.pop %v823
  %v825 = vmul.f32 1.0, %v824
  %v826 = vtanh.pop %v819
  %v827 = vmul.f32 %v825, %v745
  %829 = vrot.lane.b32.xlu0 %v826, 32
  %v830 = vpop.permute.xlu0 %829
  %v832 = vmul.f32 %v825, %v830
  %834 = vrot.lane.b32.xlu0 %v832, 32
  %v835 = vpop.permute.xlu0 %834
  %v837 = vadd.f32 %v827, %v835
  %v838 = vtanh.pop %v837
  %840 = vrot.lane.b32.xlu0 %v838, 32
  %v841 = vpop.permute.xlu0 %840
  %v843 = vmul.f32 %v825, %v841
  %v844 = vpack.c.bf16 %v843, %v843
  %v847 = vunpack.c.l.s4 1966171168
  %v848 = vunpack.c.0.s8 %v847
  %v849 = vlaneseq
  %v850 = vshrl.u32 %v849, 7
  %v851 = vsub.s32 %v848, %v850
  %v852 = vrot.slane %v844, %v851
  %v854 = vunpack.c.l.s4 1966171168
  %v855 = vunpack.c.0.s8 %v854
  %v856 = vlaneseq
  %v857 = vshrl.u32 %v856, 7
  %v858 = vsub.s32 %v855, %v857
  %v859 = vrot.slane %v852, %v858
  %860 = vrot.lane.b32.xlu0 %v859, 64
  %v861 = vpop.permute.xlu0 %860
  %s863 = scalar_lea.vmem %s4, 7
  %864 = vst.msk [vmem:[%s863] sm:$0x1] %vm219, %v861
  %866 = vrot.lane.b32.xlu0 %v843, 64
  %v867 = vpop.permute.xlu0 %866
  %vm869 = vcmask 254976
  %870 = vst.msk [vmem:[#allocation3] sm:$0x3] %vm869, %v867
  %872 = vrot.lane.b32.xlu0 %v837, 96
  %v873 = vpop.permute.xlu0 %872
  %875 = vst.msk [vmem:[#allocation4] sm:$0x3] %vm869, %v873
  // Predicated region
  $region22: #{lstm_forward.3} parent=0 // pred_check
    _
  $region23: #{lstm_forward.3} parent=0 // pred_check_branch
    %877 = sbr.rel (0) target = $region25
  $region24: #{lstm_forward.3} parent=0 // pred_region
    _
  $region25: #{lstm_forward.3} parent=0 // pred_fallthru
    _
  // Predicated region
  $region26: #{lstm_forward.3} parent=0 // pred_check
    _
  $region27: #{lstm_forward.3} parent=0 // pred_check_branch
    %879 = sbr.rel (0) target = $region29
  $region28: #{lstm_forward.3} parent=0 // pred_region
    _
  $region29: #{lstm_forward.3} parent=0 // pred_fallthru
    _

</llo_original>
